<compile_context>
chip_gen: v6e
topology: v6e:2x2x1
jax: 0.10.0
libtpu: 0.0.40
codegen_flags: <defaults>
</compile_context>

<pallas_src>
import functools

import jax
import jax.numpy as jnp
from jax.experimental import pallas as pl
from jax.experimental.pallas import tpu as pltpu


def _perceiver_attn_kernel(x_ref, lat_ref,
                           gm_ref, bm_ref, gl_ref, bl_ref,
                           wq_ref, bq_ref, wk_ref, bk_ref, wv_ref, bv_ref,
                           wo_ref, bo_ref,
                           out_ref,
                           *, heads, dim_head, eps):
    f32 = jnp.float32
    H, dh = heads, dim_head
    inner = H * dh
    tb, N, D = x_ref.shape
    M = lat_ref.shape[1]
    S = N + M
    mxu_dt = wq_ref.dtype          # bf16 (MXU-native on v5e/v6e/v7x)

    # Weights / norm params (loaded once per grid step, reused for the block).
    gm = gm_ref[...]; bm = bm_ref[...]
    gl = gl_ref[...]; bl = bl_ref[...]

    def layernorm(t, g, b):        # t: (rows, D) f32 ; g, b: (1, D) f32
        mu = jnp.mean(t, axis=-1, keepdims=True)
        var = jnp.mean((t - mu) * (t - mu), axis=-1, keepdims=True)
        return (t - mu) * jax.lax.rsqrt(var + eps) * g + b

    # --- LayerNorms: batch block folded into the sublane axis (2D, f32). -----
    x2 = x_ref[...].reshape(tb * N, D).astype(f32)
    l2 = lat_ref[...].reshape(tb * M, D).astype(f32)
    xn2 = layernorm(x2, gm, bm)            # norm_media(x)        (tb*N, D)
    ln2 = layernorm(l2, gl, bl)            # norm_latents(latents)(tb*M, D)

    # kv_input = cat(x, latents, dim=-2), per batch element (sublane concat).
    kv3 = jnp.concatenate([xn2.reshape(tb, N, D), ln2.reshape(tb, M, D)], axis=1)
    kv2 = kv3.reshape(tb * S, D)

    # --- Flat, lane-dense projections (scale pre-folded into Wq / bq). -------
    ln_bf = ln2.astype(mxu_dt)
    kv_bf = kv2.astype(mxu_dt)
    q2 = jnp.dot(ln_bf, wq_ref[...], preferred_element_type=f32) + bq_ref[...]
    k2 = jnp.dot(kv_bf, wk_ref[...], preferred_element_type=f32) + bk_ref[...]
    v2 = jnp.dot(kv_bf, wv_ref[...], preferred_element_type=f32) + bv_ref[...]

    q3 = q2.reshape(tb, M, inner)          # leading-dim split (M % 8 friendly)
    k3 = k2.reshape(tb, S, inner)
    v3 = v2.reshape(tb, S, inner)

    # --- Attention core: tb-batched einsums, static unroll over heads only. --
    o_heads = []
    for h in range(H):
        lo, hi = h * dh, (h + 1) * dh
        qh = q3[:, :, lo:hi].astype(mxu_dt)            # (tb, M, dh)
        kh = k3[:, :, lo:hi].astype(mxu_dt)            # (tb, S, dh)
        vh = v3[:, :, lo:hi].astype(mxu_dt)            # (tb, S, dh)

        sim = jnp.einsum('bmd,bsd->bms', qh, kh,
                         preferred_element_type=f32)   # (tb, M, S)
        sim = sim - jnp.max(sim, axis=-1, keepdims=True)
        p = jnp.exp(sim)
        attn = p * pl.reciprocal(jnp.sum(p, axis=-1, keepdims=True), approx=True)
        o_heads.append(jnp.einsum('bms,bsd->bmd', attn.astype(mxu_dt), vh,
                                  preferred_element_type=f32))   # (tb, M, dh)

    # --- Head merge + to_out fused into ONE inner-deep matmul. ---------------
    o2 = jnp.concatenate(o_heads, axis=-1).reshape(tb * M, inner)
    out2 = jnp.dot(o2.astype(mxu_dt), wo_ref[...],
                   preferred_element_type=f32) + bo_ref[...]     # (tb*M, D)
    out_ref[...] = out2.reshape(tb, M, D).astype(out_ref.dtype)


def perceiver_attention(x, latents, params, *, heads, dim_head, eps=1e-5,
                        batch_block=None, mxu_dtype=jnp.bfloat16):
    B, N, D = x.shape
    _, M, _ = latents.shape
    inner = heads * dim_head
    scale = dim_head ** -0.5
    f32 = jnp.float32

    # ---- host-side (one-time) weight prep: flat lane-dense layouts, scale
    #      folded into the q projection, MXU operands cast to bf16. -----------
    wq = (params["wq"] * scale).astype(mxu_dtype)      # (D, inner)
    bq = (params["bq"] * scale).astype(f32)            # (1, inner)
    wkv, bkv = params["wkv"], params["bkv"]
    wk = wkv[:, :inner].astype(mxu_dtype)              # (D, inner)
    bk = bkv[:, :inner].astype(f32)
    wv = wkv[:, inner:].astype(mxu_dtype)              # (D, inner)
    bv = bkv[:, inner:].astype(f32)
    wo = params["wo"].astype(mxu_dtype)                # (inner, D)
    bo = params["bo"].astype(f32)                      # (1, D)
    gm, bm = params["gm"].astype(f32), params["bm"].astype(f32)
    gl, bl = params["gl"].astype(f32), params["bl"].astype(f32)

    # Batch block size: amortize the ~0.35us/step overhead, but keep the grid
    # at >= 2 steps when possible so megacore sharding and DMA/compute
    # pipelining are not collapsed to a single step.
    if batch_block is not None:
        assert B % batch_block == 0, "batch_block must divide the batch size"
        tb = batch_block
    else:
        tb = 1
        for cand in range(min(B, 8), 0, -1):
            if B % cand == 0 and B // cand >= 2:
                tb = cand
                break
        if B == 1:
            tb = 1

    # Per-generation VMEM limit (v7x has only 64 MiB physical; v5e/v6e 128 MiB).
    try:
        info = pltpu.get_tpu_info()
        vmem_cap = int(getattr(info, "vmem_capacity_bytes", 64 * 1024 * 1024))
    except Exception:
        vmem_cap = 64 * 1024 * 1024
    vmem_limit = min((vmem_cap * 3) // 4, 100 * 1024 * 1024)

    kernel = functools.partial(_perceiver_attn_kernel,
                               heads=heads, dim_head=dim_head, eps=eps)

    weight_args = (gm, bm, gl, bl, wq, bq, wk, bk, wv, bv, wo, bo)

    def const_spec(a):
        return pl.BlockSpec(a.shape, lambda i, _nd=a.ndim: (0,) * _nd)

    in_specs = [pl.BlockSpec((tb, N, D), lambda i: (i, 0, 0)),
                pl.BlockSpec((tb, M, D), lambda i: (i, 0, 0))]
    in_specs += [const_spec(w) for w in weight_args]

    return pl.pallas_call(
        kernel,
        out_shape=jax.ShapeDtypeStruct((B, M, D), x.dtype),
        grid=(B // tb,),
        in_specs=in_specs,
        out_specs=pl.BlockSpec((tb, M, D), lambda i: (i, 0, 0)),
        compiler_params=pltpu.CompilerParams(
            dimension_semantics=("parallel",),         # batch blocks independent
            vmem_limit_bytes=vmem_limit),
    )(x, latents, *weight_args)


def perceiver_attention_ref(x, latents, params, *, heads, dim_head, eps=1e-5):
    """Pure-JAX f32 reference mirroring the PyTorch forward (indices=None)."""
    inner = heads * dim_head
    scale = dim_head ** -0.5

    def ln(t, g, b):
        mu = jnp.mean(t, axis=-1, keepdims=True)
        var = jnp.mean((t - mu) ** 2, axis=-1, keepdims=True)
        return (t - mu) / jnp.sqrt(var + eps) * g + b

    xn = ln(x, params["gm"][0], params["bm"][0])
    lt = ln(latents, params["gl"][0], params["bl"][0])
    q = lt @ params["wq"] + params["bq"][0]
    kv_in = jnp.concatenate([xn, lt], axis=-2)
    kv = kv_in @ params["wkv"] + params["bkv"][0]
    k, v = kv[..., :inner], kv[..., inner:]

    def split(t):
        b, n, _ = t.shape
        return t.reshape(b, n, heads, dim_head).transpose(0, 2, 1, 3)

    qh, kh, vh = split(q) * scale, split(k), split(v)
    sim = jnp.einsum("bhid,bhjd->bhij", qh, kh)
    sim = sim - jnp.max(sim, axis=-1, keepdims=True)
    attn = jax.nn.softmax(sim, axis=-1)
    out = jnp.einsum("bhij,bhjd->bhid", attn, vh)
    out = out.transpose(0, 2, 1, 3).reshape(x.shape[0], latents.shape[1], inner)
    return out @ params["wo"] + params["bo"][0]


def make_params(key, dim, heads, dim_head):
    inner = heads * dim_head
    ks = jax.random.split(key, 8)
    f32 = jnp.float32
    return {
        # LayerNorm(dim) x2
        "gm": (1.0 + 0.1 * jax.random.normal(ks[0], (1, dim))).astype(f32),
        "bm": (0.1 * jax.random.normal(ks[1], (1, dim))).astype(f32),
        "gl": (1.0 + 0.1 * jax.random.normal(ks[2], (1, dim))).astype(f32),
        "bl": (0.1 * jax.random.normal(ks[3], (1, dim))).astype(f32),
        # to_q: Linear(dim, inner)  (stored transposed: (in, out))
        "wq": (0.05 * jax.random.normal(ks[4], (dim, inner))).astype(f32),
        "bq": jnp.zeros((1, inner), f32),
        # to_kv: Linear(dim, 2*inner)
        "wkv": (0.05 * jax.random.normal(ks[5], (dim, 2 * inner))).astype(f32),
        "bkv": (0.01 * jax.random.normal(ks[6], (1, 2 * inner))).astype(f32),
        # to_out: Linear(inner, dim)
        "wo": (0.05 * jax.random.normal(ks[7], (inner, dim))).astype(f32),
        "bo": jnp.zeros((1, dim), f32),
    }


if __name__ == "__main__":
    B, N, M, DIM = 2, 16, 8, 32
    HEADS, DIM_HEAD = 4, 8

    key = jax.random.PRNGKey(0)
    kx, kl, kp = jax.random.split(key, 3)
    x = jax.random.normal(kx, (B, N, DIM), dtype=jnp.float32)
    latents = jax.random.normal(kl, (B, M, DIM), dtype=jnp.float32)
    params = make_params(kp, DIM, HEADS, DIM_HEAD)

    out = perceiver_attention(x, latents, params, heads=HEADS, dim_head=DIM_HEAD)
    out = jax.block_until_ready(out)

    ref = perceiver_attention_ref(x, latents, params, heads=HEADS, dim_head=DIM_HEAD)
    assert out.shape == (B, M, DIM)
    # Tolerance accounts for bf16 MXU operands and the EUP approximate
    # reciprocal in the softmax normalization (f32 reference is exact).
    assert jnp.allclose(out, ref, atol=2e-2, rtol=2e-2), \
        f"max abs diff {jnp.max(jnp.abs(out - ref))}"
    print("KERNEL_OK")
</pallas_src>

<mosaic_0001>
module attributes {stable_mosaic.version = 11 : i64} {
  func.func @_perceiver_attn_kernel(%arg0: i32, %arg1: memref<1x16x32xf32, #tpu.memory_space<vmem>>, %arg2: memref<1x8x32xf32, #tpu.memory_space<vmem>>, %arg3: memref<1x32xf32, #tpu.memory_space<vmem>>, %arg4: memref<1x32xf32, #tpu.memory_space<vmem>>, %arg5: memref<1x32xf32, #tpu.memory_space<vmem>>, %arg6: memref<1x32xf32, #tpu.memory_space<vmem>>, %arg7: memref<32x32xbf16, #tpu.memory_space<vmem>>, %arg8: memref<1x32xf32, #tpu.memory_space<vmem>>, %arg9: memref<32x32xbf16, #tpu.memory_space<vmem>>, %arg10: memref<1x32xf32, #tpu.memory_space<vmem>>, %arg11: memref<32x32xbf16, #tpu.memory_space<vmem>>, %arg12: memref<1x32xf32, #tpu.memory_space<vmem>>, %arg13: memref<32x32xbf16, #tpu.memory_space<vmem>>, %arg14: memref<1x32xf32, #tpu.memory_space<vmem>>, %arg15: memref<1x8x32xf32, #tpu.memory_space<vmem>>) attributes {dimension_semantics = [#tpu.dimension_semantics<parallel>], iteration_bounds = array<i64: 2>, scalar_prefetch = 0 : i64, scratch_operands = 0 : i64, tpu.core_type = #tpu.core_type<tc>, window_params = [{transform_indices = @transform_0, window_bounds = array<i64: 1, 16, 32>}, {transform_indices = @transform_1, window_bounds = array<i64: 1, 8, 32>}, {pipeline_mode = #tpu.pipeline_mode<synchronous>, transform_indices = @transform_2, window_bounds = array<i64: 1, 32>}, {pipeline_mode = #tpu.pipeline_mode<synchronous>, transform_indices = @transform_3, window_bounds = array<i64: 1, 32>}, {pipeline_mode = #tpu.pipeline_mode<synchronous>, transform_indices = @transform_4, window_bounds = array<i64: 1, 32>}, {pipeline_mode = #tpu.pipeline_mode<synchronous>, transform_indices = @transform_5, window_bounds = array<i64: 1, 32>}, {pipeline_mode = #tpu.pipeline_mode<synchronous>, transform_indices = @transform_6, window_bounds = array<i64: 32, 32>}, {pipeline_mode = #tpu.pipeline_mode<synchronous>, transform_indices = @transform_7, window_bounds = array<i64: 1, 32>}, {pipeline_mode = #tpu.pipeline_mode<synchronous>, transform_indices = @transform_8, window_bounds = array<i64: 32, 32>}, {pipeline_mode = #tpu.pipeline_mode<synchronous>, transform_indices = @transform_9, window_bounds = array<i64: 1, 32>}, {pipeline_mode = #tpu.pipeline_mode<synchronous>, transform_indices = @transform_10, window_bounds = array<i64: 32, 32>}, {pipeline_mode = #tpu.pipeline_mode<synchronous>, transform_indices = @transform_11, window_bounds = array<i64: 1, 32>}, {pipeline_mode = #tpu.pipeline_mode<synchronous>, transform_indices = @transform_12, window_bounds = array<i64: 32, 32>}, {pipeline_mode = #tpu.pipeline_mode<synchronous>, transform_indices = @transform_13, window_bounds = array<i64: 1, 32>}, {transform_indices = @transform_14, window_bounds = array<i64: 1, 8, 32>}]} {
    %c0 = arith.constant 0 : index
    %c0_0 = arith.constant 0 : index
    %0 = vector.load %arg3[%c0, %c0_0] : memref<1x32xf32, #tpu.memory_space<vmem>>, vector<1x32xf32>
    %c0_1 = arith.constant 0 : index
    %c0_2 = arith.constant 0 : index
    %1 = vector.load %arg4[%c0_1, %c0_2] : memref<1x32xf32, #tpu.memory_space<vmem>>, vector<1x32xf32>
    %c0_3 = arith.constant 0 : index
    %c0_4 = arith.constant 0 : index
    %2 = vector.load %arg5[%c0_3, %c0_4] : memref<1x32xf32, #tpu.memory_space<vmem>>, vector<1x32xf32>
    %c0_5 = arith.constant 0 : index
    %c0_6 = arith.constant 0 : index
    %3 = vector.load %arg6[%c0_5, %c0_6] : memref<1x32xf32, #tpu.memory_space<vmem>>, vector<1x32xf32>
    %c0_7 = arith.constant 0 : index
    %c0_8 = arith.constant 0 : index
    %c0_9 = arith.constant 0 : index
    %4 = vector.load %arg1[%c0_7, %c0_8, %c0_9] : memref<1x16x32xf32, #tpu.memory_space<vmem>>, vector<1x16x32xf32>
    %5 = vector.shape_cast %4 : vector<1x16x32xf32> to vector<16x32xf32>
    %c0_10 = arith.constant 0 : index
    %c0_11 = arith.constant 0 : index
    %c0_12 = arith.constant 0 : index
    %6 = vector.load %arg2[%c0_10, %c0_11, %c0_12] : memref<1x8x32xf32, #tpu.memory_space<vmem>>, vector<1x8x32xf32>
    %7 = vector.shape_cast %6 : vector<1x8x32xf32> to vector<8x32xf32>
    %cst = arith.constant dense<0.000000e+00> : vector<16xf32>
    %8 = vector.multi_reduction <add>, %5, %cst [1] : vector<16x32xf32> to vector<16xf32>
    %9 = vector.shape_cast %8 : vector<16xf32> to vector<16x1xf32>
    %cst_13 = arith.constant 3.200000e+01 : f32
    %10 = vector.broadcast %cst_13 : f32 to vector<16x1xf32>
    %11 = arith.divf %9, %10 : vector<16x1xf32>
    %12 = vector.broadcast %11 : vector<16x1xf32> to vector<16x32xf32>
    %13 = arith.subf %5, %12 : vector<16x32xf32>
    %14 = vector.broadcast %11 : vector<16x1xf32> to vector<16x32xf32>
    %15 = arith.subf %5, %14 : vector<16x32xf32>
    %16 = arith.mulf %13, %15 : vector<16x32xf32>
    %cst_14 = arith.constant dense<0.000000e+00> : vector<16xf32>
    %17 = vector.multi_reduction <add>, %16, %cst_14 [1] : vector<16x32xf32> to vector<16xf32>
    %18 = vector.shape_cast %17 : vector<16xf32> to vector<16x1xf32>
    %cst_15 = arith.constant 3.200000e+01 : f32
    %19 = vector.broadcast %cst_15 : f32 to vector<16x1xf32>
    %20 = arith.divf %18, %19 : vector<16x1xf32>
    %21 = vector.broadcast %11 : vector<16x1xf32> to vector<16x32xf32>
    %22 = arith.subf %5, %21 : vector<16x32xf32>
    %cst_16 = arith.constant 9.99999974E-6 : f32
    %23 = vector.broadcast %cst_16 : f32 to vector<16x1xf32>
    %24 = arith.addf %20, %23 : vector<16x1xf32>
    %25 = math.rsqrt %24 : vector<16x1xf32>
    %26 = vector.broadcast %25 : vector<16x1xf32> to vector<16x32xf32>
    %27 = arith.mulf %22, %26 : vector<16x32xf32>
    %28 = vector.broadcast %0 : vector<1x32xf32> to vector<16x32xf32>
    %29 = arith.mulf %27, %28 : vector<16x32xf32>
    %30 = vector.broadcast %1 : vector<1x32xf32> to vector<16x32xf32>
    %31 = arith.addf %29, %30 : vector<16x32xf32>
    %cst_17 = arith.constant dense<0.000000e+00> : vector<8xf32>
    %32 = vector.multi_reduction <add>, %7, %cst_17 [1] : vector<8x32xf32> to vector<8xf32>
    %33 = vector.shape_cast %32 : vector<8xf32> to vector<8x1xf32>
    %cst_18 = arith.constant 3.200000e+01 : f32
    %34 = vector.broadcast %cst_18 : f32 to vector<8x1xf32>
    %35 = arith.divf %33, %34 : vector<8x1xf32>
    %36 = vector.broadcast %35 : vector<8x1xf32> to vector<8x32xf32>
    %37 = arith.subf %7, %36 : vector<8x32xf32>
    %38 = vector.broadcast %35 : vector<8x1xf32> to vector<8x32xf32>
    %39 = arith.subf %7, %38 : vector<8x32xf32>
    %40 = arith.mulf %37, %39 : vector<8x32xf32>
    %cst_19 = arith.constant dense<0.000000e+00> : vector<8xf32>
    %41 = vector.multi_reduction <add>, %40, %cst_19 [1] : vector<8x32xf32> to vector<8xf32>
    %42 = vector.shape_cast %41 : vector<8xf32> to vector<8x1xf32>
    %cst_20 = arith.constant 3.200000e+01 : f32
    %43 = vector.broadcast %cst_20 : f32 to vector<8x1xf32>
    %44 = arith.divf %42, %43 : vector<8x1xf32>
    %45 = vector.broadcast %35 : vector<8x1xf32> to vector<8x32xf32>
    %46 = arith.subf %7, %45 : vector<8x32xf32>
    %cst_21 = arith.constant 9.99999974E-6 : f32
    %47 = vector.broadcast %cst_21 : f32 to vector<8x1xf32>
    %48 = arith.addf %44, %47 : vector<8x1xf32>
    %49 = math.rsqrt %48 : vector<8x1xf32>
    %50 = vector.broadcast %49 : vector<8x1xf32> to vector<8x32xf32>
    %51 = arith.mulf %46, %50 : vector<8x32xf32>
    %52 = vector.broadcast %2 : vector<1x32xf32> to vector<8x32xf32>
    %53 = arith.mulf %51, %52 : vector<8x32xf32>
    %54 = vector.broadcast %3 : vector<1x32xf32> to vector<8x32xf32>
    %55 = arith.addf %53, %54 : vector<8x32xf32>
    %56 = vector.shape_cast %31 : vector<16x32xf32> to vector<1x16x32xf32>
    %57 = vector.shape_cast %55 : vector<8x32xf32> to vector<1x8x32xf32>
    %58 = tpu.concatenate %56, %57 in 1 : vector<1x16x32xf32>, vector<1x8x32xf32> -> vector<1x24x32xf32>
    %59 = vector.shape_cast %58 : vector<1x24x32xf32> to vector<24x32xf32>
    %60 = arith.truncf %55 : vector<8x32xf32> to vector<8x32xbf16>
    %61 = arith.truncf %59 : vector<24x32xf32> to vector<24x32xbf16>
    %c0_22 = arith.constant 0 : index
    %c0_23 = arith.constant 0 : index
    %62 = vector.load %arg7[%c0_22, %c0_23] : memref<32x32xbf16, #tpu.memory_space<vmem>>, vector<32x32xbf16>
    %cst_24 = arith.constant dense<0.000000e+00> : vector<8x32xf32>
    %63 = tpu.matmul %60, %62, %cst_24 {dimension_numbers = #tpu.dot_dimension_numbers<[1], [0], [0], [1], [0, 0, 1, 1], [], []>} : vector<8x32xbf16>, vector<32x32xbf16>, vector<8x32xf32> -> vector<8x32xf32>
    %c0_25 = arith.constant 0 : index
    %c0_26 = arith.constant 0 : index
    %64 = vector.load %arg8[%c0_25, %c0_26] : memref<1x32xf32, #tpu.memory_space<vmem>>, vector<1x32xf32>
    %65 = vector.broadcast %64 : vector<1x32xf32> to vector<8x32xf32>
    %66 = arith.addf %63, %65 : vector<8x32xf32>
    %c0_27 = arith.constant 0 : index
    %c0_28 = arith.constant 0 : index
    %67 = vector.load %arg9[%c0_27, %c0_28] : memref<32x32xbf16, #tpu.memory_space<vmem>>, vector<32x32xbf16>
    %cst_29 = arith.constant dense<0.000000e+00> : vector<24x32xf32>
    %68 = tpu.matmul %61, %67, %cst_29 {dimension_numbers = #tpu.dot_dimension_numbers<[1], [0], [0], [1], [0, 0, 1, 1], [], []>} : vector<24x32xbf16>, vector<32x32xbf16>, vector<24x32xf32> -> vector<24x32xf32>
    %c0_30 = arith.constant 0 : index
    %c0_31 = arith.constant 0 : index
    %69 = vector.load %arg10[%c0_30, %c0_31] : memref<1x32xf32, #tpu.memory_space<vmem>>, vector<1x32xf32>
    %70 = vector.broadcast %69 : vector<1x32xf32> to vector<24x32xf32>
    %71 = arith.addf %68, %70 : vector<24x32xf32>
    %c0_32 = arith.constant 0 : index
    %c0_33 = arith.constant 0 : index
    %72 = vector.load %arg11[%c0_32, %c0_33] : memref<32x32xbf16, #tpu.memory_space<vmem>>, vector<32x32xbf16>
    %cst_34 = arith.constant dense<0.000000e+00> : vector<24x32xf32>
    %73 = tpu.matmul %61, %72, %cst_34 {dimension_numbers = #tpu.dot_dimension_numbers<[1], [0], [0], [1], [0, 0, 1, 1], [], []>} : vector<24x32xbf16>, vector<32x32xbf16>, vector<24x32xf32> -> vector<24x32xf32>
    %c0_35 = arith.constant 0 : index
    %c0_36 = arith.constant 0 : index
    %74 = vector.load %arg12[%c0_35, %c0_36] : memref<1x32xf32, #tpu.memory_space<vmem>>, vector<1x32xf32>
    %75 = vector.broadcast %74 : vector<1x32xf32> to vector<24x32xf32>
    %76 = arith.addf %73, %75 : vector<24x32xf32>
    %77 = vector.shape_cast %66 : vector<8x32xf32> to vector<1x8x32xf32>
    %78 = vector.shape_cast %71 : vector<24x32xf32> to vector<1x24x32xf32>
    %79 = vector.shape_cast %76 : vector<24x32xf32> to vector<1x24x32xf32>
    %80 = vector.extract_strided_slice %77 {offsets = [0, 0, 0], sizes = [1, 8, 8], strides = [1, 1, 1]} : vector<1x8x32xf32> to vector<1x8x8xf32>
    %81 = arith.truncf %80 : vector<1x8x8xf32> to vector<1x8x8xbf16>
    %82 = vector.extract_strided_slice %78 {offsets = [0, 0, 0], sizes = [1, 24, 8], strides = [1, 1, 1]} : vector<1x24x32xf32> to vector<1x24x8xf32>
    %83 = arith.truncf %82 : vector<1x24x8xf32> to vector<1x24x8xbf16>
    %84 = vector.extract_strided_slice %79 {offsets = [0, 0, 0], sizes = [1, 24, 8], strides = [1, 1, 1]} : vector<1x24x32xf32> to vector<1x24x8xf32>
    %85 = arith.truncf %84 : vector<1x24x8xf32> to vector<1x24x8xbf16>
    "tpu.trace_start"() <{level = 10 : i32, message = "bmd,bsd->bms"}> : () -> ()
    %cst_37 = arith.constant dense<0.000000e+00> : vector<1x8x24xf32>
    %86 = tpu.matmul %81, %83, %cst_37 {dimension_numbers = #tpu.dot_dimension_numbers<[2], [2], [1], [1], [0, 0, 0, 1, 1, 1], [0], [0]>} : vector<1x8x8xbf16>, vector<1x24x8xbf16>, vector<1x8x24xf32> -> vector<1x8x24xf32>
    "tpu.trace_stop"() : () -> ()
    %cst_38 = arith.constant dense<0xFF800000> : vector<1x8xf32>
    %87 = vector.multi_reduction <maximumf>, %86, %cst_38 [2] : vector<1x8x24xf32> to vector<1x8xf32>
    %88 = vector.shape_cast %87 : vector<1x8xf32> to vector<1x8x1xf32>
    %89 = vector.broadcast %88 : vector<1x8x1xf32> to vector<1x8x24xf32>
    %90 = arith.subf %86, %89 : vector<1x8x24xf32>
    %91 = math.exp %90 : vector<1x8x24xf32>
    %cst_39 = arith.constant dense<0.000000e+00> : vector<1x8xf32>
    %92 = vector.multi_reduction <add>, %91, %cst_39 [2] : vector<1x8x24xf32> to vector<1x8xf32>
    %93 = vector.shape_cast %92 : vector<1x8xf32> to vector<1x8x1xf32>
    %94 = tpu.reciprocal %93 {approx = true} : vector<1x8x1xf32> -> vector<1x8x1xf32>
    %95 = vector.broadcast %94 : vector<1x8x1xf32> to vector<1x8x24xf32>
    %96 = arith.mulf %91, %95 : vector<1x8x24xf32>
    %97 = arith.truncf %96 : vector<1x8x24xf32> to vector<1x8x24xbf16>
    "tpu.trace_start"() <{level = 10 : i32, message = "bms,bsd->bmd"}> : () -> ()
    %cst_40 = arith.constant dense<0.000000e+00> : vector<1x8x8xf32>
    %98 = tpu.matmul %97, %85, %cst_40 {dimension_numbers = #tpu.dot_dimension_numbers<[2], [1], [1], [2], [0, 0, 0, 1, 1, 2], [0], [0]>} : vector<1x8x24xbf16>, vector<1x24x8xbf16>, vector<1x8x8xf32> -> vector<1x8x8xf32>
    "tpu.trace_stop"() : () -> ()
    %99 = vector.extract_strided_slice %77 {offsets = [0, 0, 8], sizes = [1, 8, 8], strides = [1, 1, 1]} : vector<1x8x32xf32> to vector<1x8x8xf32>
    %100 = arith.truncf %99 : vector<1x8x8xf32> to vector<1x8x8xbf16>
    %101 = vector.extract_strided_slice %78 {offsets = [0, 0, 8], sizes = [1, 24, 8], strides = [1, 1, 1]} : vector<1x24x32xf32> to vector<1x24x8xf32>
    %102 = arith.truncf %101 : vector<1x24x8xf32> to vector<1x24x8xbf16>
    %103 = vector.extract_strided_slice %79 {offsets = [0, 0, 8], sizes = [1, 24, 8], strides = [1, 1, 1]} : vector<1x24x32xf32> to vector<1x24x8xf32>
    %104 = arith.truncf %103 : vector<1x24x8xf32> to vector<1x24x8xbf16>
    "tpu.trace_start"() <{level = 10 : i32, message = "bmd,bsd->bms"}> : () -> ()
    %cst_41 = arith.constant dense<0.000000e+00> : vector<1x8x24xf32>
    %105 = tpu.matmul %100, %102, %cst_41 {dimension_numbers = #tpu.dot_dimension_numbers<[2], [2], [1], [1], [0, 0, 0, 1, 1, 1], [0], [0]>} : vector<1x8x8xbf16>, vector<1x24x8xbf16>, vector<1x8x24xf32> -> vector<1x8x24xf32>
    "tpu.trace_stop"() : () -> ()
    %cst_42 = arith.constant dense<0xFF800000> : vector<1x8xf32>
    %106 = vector.multi_reduction <maximumf>, %105, %cst_42 [2] : vector<1x8x24xf32> to vector<1x8xf32>
    %107 = vector.shape_cast %106 : vector<1x8xf32> to vector<1x8x1xf32>
    %108 = vector.broadcast %107 : vector<1x8x1xf32> to vector<1x8x24xf32>
    %109 = arith.subf %105, %108 : vector<1x8x24xf32>
    %110 = math.exp %109 : vector<1x8x24xf32>
    %cst_43 = arith.constant dense<0.000000e+00> : vector<1x8xf32>
    %111 = vector.multi_reduction <add>, %110, %cst_43 [2] : vector<1x8x24xf32> to vector<1x8xf32>
    %112 = vector.shape_cast %111 : vector<1x8xf32> to vector<1x8x1xf32>
    %113 = tpu.reciprocal %112 {approx = true} : vector<1x8x1xf32> -> vector<1x8x1xf32>
    %114 = vector.broadcast %113 : vector<1x8x1xf32> to vector<1x8x24xf32>
    %115 = arith.mulf %110, %114 : vector<1x8x24xf32>
    %116 = arith.truncf %115 : vector<1x8x24xf32> to vector<1x8x24xbf16>
    "tpu.trace_start"() <{level = 10 : i32, message = "bms,bsd->bmd"}> : () -> ()
    %cst_44 = arith.constant dense<0.000000e+00> : vector<1x8x8xf32>
    %117 = tpu.matmul %116, %104, %cst_44 {dimension_numbers = #tpu.dot_dimension_numbers<[2], [1], [1], [2], [0, 0, 0, 1, 1, 2], [0], [0]>} : vector<1x8x24xbf16>, vector<1x24x8xbf16>, vector<1x8x8xf32> -> vector<1x8x8xf32>
    "tpu.trace_stop"() : () -> ()
    %118 = vector.extract_strided_slice %77 {offsets = [0, 0, 16], sizes = [1, 8, 8], strides = [1, 1, 1]} : vector<1x8x32xf32> to vector<1x8x8xf32>
    %119 = arith.truncf %118 : vector<1x8x8xf32> to vector<1x8x8xbf16>
    %120 = vector.extract_strided_slice %78 {offsets = [0, 0, 16], sizes = [1, 24, 8], strides = [1, 1, 1]} : vector<1x24x32xf32> to vector<1x24x8xf32>
    %121 = arith.truncf %120 : vector<1x24x8xf32> to vector<1x24x8xbf16>
    %122 = vector.extract_strided_slice %79 {offsets = [0, 0, 16], sizes = [1, 24, 8], strides = [1, 1, 1]} : vector<1x24x32xf32> to vector<1x24x8xf32>
    %123 = arith.truncf %122 : vector<1x24x8xf32> to vector<1x24x8xbf16>
    "tpu.trace_start"() <{level = 10 : i32, message = "bmd,bsd->bms"}> : () -> ()
    %cst_45 = arith.constant dense<0.000000e+00> : vector<1x8x24xf32>
    %124 = tpu.matmul %119, %121, %cst_45 {dimension_numbers = #tpu.dot_dimension_numbers<[2], [2], [1], [1], [0, 0, 0, 1, 1, 1], [0], [0]>} : vector<1x8x8xbf16>, vector<1x24x8xbf16>, vector<1x8x24xf32> -> vector<1x8x24xf32>
    "tpu.trace_stop"() : () -> ()
    %cst_46 = arith.constant dense<0xFF800000> : vector<1x8xf32>
    %125 = vector.multi_reduction <maximumf>, %124, %cst_46 [2] : vector<1x8x24xf32> to vector<1x8xf32>
    %126 = vector.shape_cast %125 : vector<1x8xf32> to vector<1x8x1xf32>
    %127 = vector.broadcast %126 : vector<1x8x1xf32> to vector<1x8x24xf32>
    %128 = arith.subf %124, %127 : vector<1x8x24xf32>
    %129 = math.exp %128 : vector<1x8x24xf32>
    %cst_47 = arith.constant dense<0.000000e+00> : vector<1x8xf32>
    %130 = vector.multi_reduction <add>, %129, %cst_47 [2] : vector<1x8x24xf32> to vector<1x8xf32>
    %131 = vector.shape_cast %130 : vector<1x8xf32> to vector<1x8x1xf32>
    %132 = tpu.reciprocal %131 {approx = true} : vector<1x8x1xf32> -> vector<1x8x1xf32>
    %133 = vector.broadcast %132 : vector<1x8x1xf32> to vector<1x8x24xf32>
    %134 = arith.mulf %129, %133 : vector<1x8x24xf32>
    %135 = arith.truncf %134 : vector<1x8x24xf32> to vector<1x8x24xbf16>
    "tpu.trace_start"() <{level = 10 : i32, message = "bms,bsd->bmd"}> : () -> ()
    %cst_48 = arith.constant dense<0.000000e+00> : vector<1x8x8xf32>
    %136 = tpu.matmul %135, %123, %cst_48 {dimension_numbers = #tpu.dot_dimension_numbers<[2], [1], [1], [2], [0, 0, 0, 1, 1, 2], [0], [0]>} : vector<1x8x24xbf16>, vector<1x24x8xbf16>, vector<1x8x8xf32> -> vector<1x8x8xf32>
    "tpu.trace_stop"() : () -> ()
    %137 = vector.extract_strided_slice %77 {offsets = [0, 0, 24], sizes = [1, 8, 8], strides = [1, 1, 1]} : vector<1x8x32xf32> to vector<1x8x8xf32>
    %138 = arith.truncf %137 : vector<1x8x8xf32> to vector<1x8x8xbf16>
    %139 = vector.extract_strided_slice %78 {offsets = [0, 0, 24], sizes = [1, 24, 8], strides = [1, 1, 1]} : vector<1x24x32xf32> to vector<1x24x8xf32>
    %140 = arith.truncf %139 : vector<1x24x8xf32> to vector<1x24x8xbf16>
    %141 = vector.extract_strided_slice %79 {offsets = [0, 0, 24], sizes = [1, 24, 8], strides = [1, 1, 1]} : vector<1x24x32xf32> to vector<1x24x8xf32>
    %142 = arith.truncf %141 : vector<1x24x8xf32> to vector<1x24x8xbf16>
    "tpu.trace_start"() <{level = 10 : i32, message = "bmd,bsd->bms"}> : () -> ()
    %cst_49 = arith.constant dense<0.000000e+00> : vector<1x8x24xf32>
    %143 = tpu.matmul %138, %140, %cst_49 {dimension_numbers = #tpu.dot_dimension_numbers<[2], [2], [1], [1], [0, 0, 0, 1, 1, 1], [0], [0]>} : vector<1x8x8xbf16>, vector<1x24x8xbf16>, vector<1x8x24xf32> -> vector<1x8x24xf32>
    "tpu.trace_stop"() : () -> ()
    %cst_50 = arith.constant dense<0xFF800000> : vector<1x8xf32>
    %144 = vector.multi_reduction <maximumf>, %143, %cst_50 [2] : vector<1x8x24xf32> to vector<1x8xf32>
    %145 = vector.shape_cast %144 : vector<1x8xf32> to vector<1x8x1xf32>
    %146 = vector.broadcast %145 : vector<1x8x1xf32> to vector<1x8x24xf32>
    %147 = arith.subf %143, %146 : vector<1x8x24xf32>
    %148 = math.exp %147 : vector<1x8x24xf32>
    %cst_51 = arith.constant dense<0.000000e+00> : vector<1x8xf32>
    %149 = vector.multi_reduction <add>, %148, %cst_51 [2] : vector<1x8x24xf32> to vector<1x8xf32>
    %150 = vector.shape_cast %149 : vector<1x8xf32> to vector<1x8x1xf32>
    %151 = tpu.reciprocal %150 {approx = true} : vector<1x8x1xf32> -> vector<1x8x1xf32>
    %152 = vector.broadcast %151 : vector<1x8x1xf32> to vector<1x8x24xf32>
    %153 = arith.mulf %148, %152 : vector<1x8x24xf32>
    %154 = arith.truncf %153 : vector<1x8x24xf32> to vector<1x8x24xbf16>
    "tpu.trace_start"() <{level = 10 : i32, message = "bms,bsd->bmd"}> : () -> ()
    %cst_52 = arith.constant dense<0.000000e+00> : vector<1x8x8xf32>
    %155 = tpu.matmul %154, %142, %cst_52 {dimension_numbers = #tpu.dot_dimension_numbers<[2], [1], [1], [2], [0, 0, 0, 1, 1, 2], [0], [0]>} : vector<1x8x24xbf16>, vector<1x24x8xbf16>, vector<1x8x8xf32> -> vector<1x8x8xf32>
    "tpu.trace_stop"() : () -> ()
    %156 = tpu.concatenate %98, %117, %136, %155 in 2 : vector<1x8x8xf32>, vector<1x8x8xf32>, vector<1x8x8xf32>, vector<1x8x8xf32> -> vector<1x8x32xf32>
    %157 = vector.shape_cast %156 : vector<1x8x32xf32> to vector<8x32xf32>
    %158 = arith.truncf %157 : vector<8x32xf32> to vector<8x32xbf16>
    %c0_53 = arith.constant 0 : index
    %c0_54 = arith.constant 0 : index
    %159 = vector.load %arg13[%c0_53, %c0_54] : memref<32x32xbf16, #tpu.memory_space<vmem>>, vector<32x32xbf16>
    %cst_55 = arith.constant dense<0.000000e+00> : vector<8x32xf32>
    %160 = tpu.matmul %158, %159, %cst_55 {dimension_numbers = #tpu.dot_dimension_numbers<[1], [0], [0], [1], [0, 0, 1, 1], [], []>} : vector<8x32xbf16>, vector<32x32xbf16>, vector<8x32xf32> -> vector<8x32xf32>
    %c0_56 = arith.constant 0 : index
    %c0_57 = arith.constant 0 : index
    %161 = vector.load %arg14[%c0_56, %c0_57] : memref<1x32xf32, #tpu.memory_space<vmem>>, vector<1x32xf32>
    %162 = vector.broadcast %161 : vector<1x32xf32> to vector<8x32xf32>
    %163 = arith.addf %160, %162 : vector<8x32xf32>
    %164 = vector.shape_cast %163 : vector<8x32xf32> to vector<1x8x32xf32>
    %c0_58 = arith.constant 0 : index
    %c0_59 = arith.constant 0 : index
    %c0_60 = arith.constant 0 : index
    %165 = vector.load %arg15[%c0_58, %c0_59, %c0_60] : memref<1x8x32xf32, #tpu.memory_space<vmem>>, vector<1x8x32xf32>
    tpu.vector_store %arg15[%c0_58, %c0_59, %c0_60], %164 {strides = array<i32>} : memref<1x8x32xf32, #tpu.memory_space<vmem>>, vector<1x8x32xf32>,
    return
  }
  func.func @transform_0(%arg0: i32) -> (i32, i32, i32) {
    %c0_i32 = arith.constant 0 : i32
    %c0_i32_0 = arith.constant 0 : i32
    %c0_i32_1 = arith.constant 0 : i32
    return %arg0, %c0_i32, %c0_i32_0 : i32, i32, i32
  }
  func.func @transform_1(%arg0: i32) -> (i32, i32, i32) {
    %c0_i32 = arith.constant 0 : i32
    %c0_i32_0 = arith.constant 0 : i32
    %c0_i32_1 = arith.constant 0 : i32
    return %arg0, %c0_i32, %c0_i32_0 : i32, i32, i32
  }
  func.func @transform_2(%arg0: i32) -> (i32, i32) {
    %c0_i32 = arith.constant 0 : i32
    %c0_i32_0 = arith.constant 0 : i32
    %c0_i32_1 = arith.constant 0 : i32
    return %c0_i32, %c0_i32_0 : i32, i32
  }
  func.func @transform_3(%arg0: i32) -> (i32, i32) {
    %c0_i32 = arith.constant 0 : i32
    %c0_i32_0 = arith.constant 0 : i32
    %c0_i32_1 = arith.constant 0 : i32
    return %c0_i32, %c0_i32_0 : i32, i32
  }
  func.func @transform_4(%arg0: i32) -> (i32, i32) {
    %c0_i32 = arith.constant 0 : i32
    %c0_i32_0 = arith.constant 0 : i32
    %c0_i32_1 = arith.constant 0 : i32
    return %c0_i32, %c0_i32_0 : i32, i32
  }
  func.func @transform_5(%arg0: i32) -> (i32, i32) {
    %c0_i32 = arith.constant 0 : i32
    %c0_i32_0 = arith.constant 0 : i32
    %c0_i32_1 = arith.constant 0 : i32
    return %c0_i32, %c0_i32_0 : i32, i32
  }
  func.func @transform_6(%arg0: i32) -> (i32, i32) {
    %c0_i32 = arith.constant 0 : i32
    %c0_i32_0 = arith.constant 0 : i32
    %c0_i32_1 = arith.constant 0 : i32
    return %c0_i32, %c0_i32_0 : i32, i32
  }
  func.func @transform_7(%arg0: i32) -> (i32, i32) {
    %c0_i32 = arith.constant 0 : i32
    %c0_i32_0 = arith.constant 0 : i32
    %c0_i32_1 = arith.constant 0 : i32
    return %c0_i32, %c0_i32_0 : i32, i32
  }
  func.func @transform_8(%arg0: i32) -> (i32, i32) {
    %c0_i32 = arith.constant 0 : i32
    %c0_i32_0 = arith.constant 0 : i32
    %c0_i32_1 = arith.constant 0 : i32
    return %c0_i32, %c0_i32_0 : i32, i32
  }
  func.func @transform_9(%arg0: i32) -> (i32, i32) {
    %c0_i32 = arith.constant 0 : i32
    %c0_i32_0 = arith.constant 0 : i32
    %c0_i32_1 = arith.constant 0 : i32
    return %c0_i32, %c0_i32_0 : i32, i32
  }
  func.func @transform_10(%arg0: i32) -> (i32, i32) {
    %c0_i32 = arith.constant 0 : i32
    %c0_i32_0 = arith.constant 0 : i32
    %c0_i32_1 = arith.constant 0 : i32
    return %c0_i32, %c0_i32_0 : i32, i32
  }
  func.func @transform_11(%arg0: i32) -> (i32, i32) {
    %c0_i32 = arith.constant 0 : i32
    %c0_i32_0 = arith.constant 0 : i32
    %c0_i32_1 = arith.constant 0 : i32
    return %c0_i32, %c0_i32_0 : i32, i32
  }
  func.func @transform_12(%arg0: i32) -> (i32, i32) {
    %c0_i32 = arith.constant 0 : i32
    %c0_i32_0 = arith.constant 0 : i32
    %c0_i32_1 = arith.constant 0 : i32
    return %c0_i32, %c0_i32_0 : i32, i32
  }
  func.func @transform_13(%arg0: i32) -> (i32, i32) {
    %c0_i32 = arith.constant 0 : i32
    %c0_i32_0 = arith.constant 0 : i32
    %c0_i32_1 = arith.constant 0 : i32
    return %c0_i32, %c0_i32_0 : i32, i32
  }
  func.func @transform_14(%arg0: i32) -> (i32, i32, i32) {
    %c0_i32 = arith.constant 0 : i32
    %c0_i32_0 = arith.constant 0 : i32
    %c0_i32_1 = arith.constant 0 : i32
    return %arg0, %c0_i32, %c0_i32_0 : i32, i32, i32
  }
}

</mosaic_0001>

<llo_original>
// kernel: tpu_custom_call.1
$region0: #{tpu_custom_call.1}
  #allocation0 [shape = 'u32[]', space=smem, size = 0x4, offset = 0x4, fixed_abs, tag = 'smem constant byte address 0x4 - core index']
  #allocation1 [shape = 'u32[144,128]{1,0:T(1,128)}', space=vmem, size = 0x12000, scoped, tag = 'internal scratch']
  %s0 = inlined_call_operand.hbm [shape: f32[2,16,32], index: 0, kind: input, shape index: {}]
  %s1 = inlined_call_operand.hbm [shape: f32[2,8,32], index: 1, kind: input, shape index: {}]
  %s2 = inlined_call_operand.vmem [shape: f32[1,32], index: 2, kind: input, shape index: {}]
  %s3 = inlined_call_operand.vmem [shape: f32[1,32], index: 3, kind: input, shape index: {}]
  %s4 = inlined_call_operand.hbm [shape: f32[1,32], index: 4, kind: input, shape index: {}]
  %s5 = inlined_call_operand.hbm [shape: f32[1,32], index: 5, kind: input, shape index: {}]
  %s6 = inlined_call_operand.hbm [shape: bf16[32,32], index: 6, kind: input, shape index: {}]
  %s7 = inlined_call_operand.hbm [shape: f32[1,32], index: 7, kind: input, shape index: {}]
  %s8 = inlined_call_operand.hbm [shape: bf16[32,32], index: 8, kind: input, shape index: {}]
  %s9 = inlined_call_operand.hbm [shape: f32[1,32], index: 9, kind: input, shape index: {}]
  %s10 = inlined_call_operand.vmem [shape: bf16[32,32], index: 10, kind: input, shape index: {}]
  %s11 = inlined_call_operand.vmem [shape: f32[1,32], index: 11, kind: input, shape index: {}]
  %s12 = inlined_call_operand.hbm [shape: bf16[32,32], index: 12, kind: input, shape index: {}]
  %s13 = inlined_call_operand.vmem [shape: f32[1,32], index: 13, kind: input, shape index: {}]
  %s14 = inlined_call_operand.hbm [shape: f32[2,8,32], index: 14, kind: output, shape index: {}]
  %s15 = sld [smem:[#allocation0]]
  $region125: #{tpu_custom_call.1} parent=0
    _
  %s17 = ssub.s32 1, %s15
  %s18 = scalar_select 0, %s17, %s15
  $region1: #{tpu_custom_call.1} parent=0
    #allocation2 [shape = 'u8[16384]{0}', space=vmem, size = 0x4000, scoped, tag = 'input window, operand 0']
    #allocation3 [shape = 's32[2]{0}', space=sflag, size = 0x8, scoped, tag = 'scoped memory for tpu_custom_call.1']
    #allocation4 [shape = 's32[2]{0}', space=sflag, size = 0x8, scoped, tag = 'scoped memory for tpu_custom_call.1']
    #allocation5 [shape = 'u8[8192]{0}', space=vmem, size = 0x2000, scoped, tag = 'input window, operand 1']
    #allocation6 [shape = 's32[2]{0}', space=sflag, size = 0x8, scoped, tag = 'scoped memory for tpu_custom_call.1']
    #allocation7 [shape = 'u8[512]{0}', space=vmem, size = 0x400, scoped, tag = 'input window, operand 4, single buffered']
    #allocation8 [shape = 'u8[512]{0}', space=vmem, size = 0x400, scoped, tag = 'input window, operand 5, single buffered']
    #allocation9 [shape = 's32[1]{0}', space=sflag, size = 0x4, scoped, tag = 'scoped memory for tpu_custom_call.1']
    #allocation10 [shape = 'u8[8192]{0}', space=vmem, size = 0x2000, scoped, tag = 'input window, operand 6, single buffered']
    #allocation11 [shape = 'u8[512]{0}', space=vmem, size = 0x400, scoped, tag = 'input window, operand 7, single buffered']
    #allocation12 [shape = 's32[1]{0}', space=sflag, size = 0x4, scoped, tag = 'scoped memory for tpu_custom_call.1']
    #allocation13 [shape = 'u8[8192]{0}', space=vmem, size = 0x2000, scoped, tag = 'input window, operand 8, single buffered']
    #allocation14 [shape = 'u8[512]{0}', space=vmem, size = 0x400, scoped, tag = 'input window, operand 9, single buffered']
    #allocation15 [shape = 's32[1]{0}', space=sflag, size = 0x4, scoped, tag = 'scoped memory for tpu_custom_call.1']
    #allocation16 [shape = 'u8[8192]{0}', space=vmem, size = 0x2000, scoped, tag = 'input window, operand 12, single buffered']
    #allocation17 [shape = 'u8[8192]{0}', space=vmem, size = 0x2000, scoped, tag = 'output window, operand 0']
    %19 = vsyncpa [#allocation3], 0
    %s20 = scalar_lea.sflag [#allocation3], 1
    %21 = vsyncpa %s20, 0
    %22 = vsyncpa [#allocation6], 0
    %s23 = scalar_lea.sflag [#allocation6], 1
    %24 = vsyncpa %s23, 0
    %25 = vsyncpa [#allocation9], 0
    %26 = vsyncpa [#allocation12], 0
    %27 = vsyncpa [#allocation15], 0
    %28 = vsyncpa [#allocation4], 0
    %s29 = scalar_lea.sflag [#allocation4], 1
    %30 = vsyncpa %s29, 0
    loop: start=0, step=1, limit=4
    $region2: #{tpu_custom_call.1} parent=1 // loop_pre_header
      _
    $region3: #{tpu_custom_call.1} parent=1 // loop_header
      %s32 = sphi 0, %s36
      %p33 = scmp.ge.s32.totalorder %s32, 4
      %s42 = sphi 0, %s44
      %s45 = sphi 0, %s42
      %s46 = sphi 0, %s45
      %s62 = sphi 0, %s46
      %s68 = sphi 0, %s70
      %s71 = sphi 0, %s68
      %s72 = sphi 0, %s71
      %s88 = sphi 0, %s72
      %s92 = sphi 0, %s92
      %s94 = sphi 0, %s92
      %s95 = sphi 0, %s94
      %s109 = sphi 0, %s95
      %s113 = sphi 0, %s113
      %s115 = sphi 0, %s113
      %s116 = sphi 0, %s115
      %s130 = sphi 0, %s116
      %s134 = sphi 0, %s134
      %s136 = sphi 0, %s134
      %s137 = sphi 0, %s136
      %s151 = sphi 0, %s137
      %s155 = sphi 0, %s155
      %s157 = sphi 0, %s155
      %s158 = sphi 0, %s157
      %s172 = sphi 0, %s158
      %s176 = sphi 0, %s176
      %s178 = sphi 0, %s176
      %s179 = sphi 0, %s178
      %s193 = sphi 0, %s179
      %s197 = sphi 0, %s197
      %s199 = sphi 0, %s197
      %s200 = sphi 0, %s199
      %s214 = sphi 0, %s200
      %s218 = sphi 0, %s218
      %s220 = sphi 0, %s218
      %s221 = sphi 0, %s220
      %s235 = sphi 0, %s221
      %s239 = sphi 0, %s239
      %s241 = sphi 0, %s239
      %s242 = sphi 0, %s241
      %s256 = sphi 0, %s242
      %s260 = sphi 0, %s260
      %s262 = sphi 0, %s260
      %s263 = sphi 0, %s262
      %s277 = sphi 0, %s263
      %s281 = sphi 0, %s281
      %s283 = sphi 0, %s281
      %s284 = sphi 0, %s283
      %s298 = sphi 0, %s284
      %s302 = sphi 0, %s302
      %s304 = sphi 0, %s302
      %s305 = sphi 0, %s304
      %s319 = sphi 0, %s305
      %s323 = sphi 0, %s323
      %s325 = sphi 0, %s323
      %s326 = sphi 0, %s325
      %s340 = sphi 0, %s326
      %s346 = sphi 0, %s348
      %s349 = sphi 0, %s346
      %s350 = sphi 0, %s349
      %s366 = sphi 0, %s350
    $region4: #{tpu_custom_call.1} parent=1 // loop_header_branch
      %35 = sbr.rel (%p33) target = $region8
    $region5: #{tpu_custom_call.1} parent=1 // loop_body
      %s37 = ssub.s32 %s32, 1
      %s38 = ssub.s32 %s32, 2
      %s39 = sadd.s32 %s32, 1
      %s40 = ssub.s32 %s32, %s39
      %p41 = scmp.eq.s32.totalorder %s40, 0
      %s43 = sadd.s32 %s42, 1
      %s44 = scalar_select %p41, %s42, %s43
      %p47 = pneg %p41
      %p48 = scmp.eq.s32.totalorder %s32, 1
      %p49 = por %p47, %p48
      %p50 = scmp.ne.s32.totalorder %s42, %s45
      %p51 = scmp.eq.s32.totalorder %s32, 0
      %p52 = por %p50, %p51
      %p53 = scmp.ne.s32.totalorder %s42, %s45
      %p54 = scmp.eq.s32.totalorder %s37, 1
      %p55 = por %p53, %p54
      %p56 = scmp.ne.s32.totalorder %s45, %s46
      %p57 = scmp.eq.s32.totalorder %s37, 0
      %p58 = por %p56, %p57
      %p59 = scmp.ne.s32.totalorder %s45, %s46
      %p60 = scmp.eq.s32.totalorder %s38, 1
      %p61 = por %p59, %p60
      %p63 = scmp.ne.s32.totalorder %s46, %s62
      %p64 = scmp.eq.s32.totalorder %s38, 0
      %p65 = por %p63, %p64
      %s66 = ssub.s32 %s32, %s39
      %p67 = scmp.eq.s32.totalorder %s66, 0
      %s69 = sadd.s32 %s68, 1
      %s70 = scalar_select %p67, %s68, %s69
      %p73 = pneg %p67
      %p74 = scmp.eq.s32.totalorder %s32, 1
      %p75 = por %p73, %p74
      %p76 = scmp.ne.s32.totalorder %s68, %s71
      %p77 = scmp.eq.s32.totalorder %s32, 0
      %p78 = por %p76, %p77
      %p79 = scmp.ne.s32.totalorder %s68, %s71
      %p80 = scmp.eq.s32.totalorder %s37, 1
      %p81 = por %p79, %p80
      %p82 = scmp.ne.s32.totalorder %s71, %s72
      %p83 = scmp.eq.s32.totalorder %s37, 0
      %p84 = por %p82, %p83
      %p85 = scmp.ne.s32.totalorder %s71, %s72
      %p86 = scmp.eq.s32.totalorder %s38, 1
      %p87 = por %p85, %p86
      %p89 = scmp.ne.s32.totalorder %s72, %s88
      %p90 = scmp.eq.s32.totalorder %s38, 0
      %p91 = por %p89, %p90
      %s93 = sadd.s32 %s92, 1
      %p96 = scmp.eq.s32.totalorder %s32, 1
      %p97 = scmp.ne.s32.totalorder %s92, %s94
      %p98 = scmp.eq.s32.totalorder %s32, 0
      %p99 = por %p97, %p98
      %p100 = scmp.ne.s32.totalorder %s92, %s94
      %p101 = scmp.eq.s32.totalorder %s37, 1
      %p102 = por %p100, %p101
      %p103 = scmp.ne.s32.totalorder %s94, %s95
      %p104 = scmp.eq.s32.totalorder %s37, 0
      %p105 = por %p103, %p104
      %p106 = scmp.ne.s32.totalorder %s94, %s95
      %p107 = scmp.eq.s32.totalorder %s38, 1
      %p108 = por %p106, %p107
      %p110 = scmp.ne.s32.totalorder %s95, %s109
      %p111 = scmp.eq.s32.totalorder %s38, 0
      %p112 = por %p110, %p111
      %s114 = sadd.s32 %s113, 1
      %p117 = scmp.eq.s32.totalorder %s32, 1
      %p118 = scmp.ne.s32.totalorder %s113, %s115
      %p119 = scmp.eq.s32.totalorder %s32, 0
      %p120 = por %p118, %p119
      %p121 = scmp.ne.s32.totalorder %s113, %s115
      %p122 = scmp.eq.s32.totalorder %s37, 1
      %p123 = por %p121, %p122
      %p124 = scmp.ne.s32.totalorder %s115, %s116
      %p125 = scmp.eq.s32.totalorder %s37, 0
      %p126 = por %p124, %p125
      %p127 = scmp.ne.s32.totalorder %s115, %s116
      %p128 = scmp.eq.s32.totalorder %s38, 1
      %p129 = por %p127, %p128
      %p131 = scmp.ne.s32.totalorder %s116, %s130
      %p132 = scmp.eq.s32.totalorder %s38, 0
      %p133 = por %p131, %p132
      %s135 = sadd.s32 %s134, 1
      %p138 = scmp.eq.s32.totalorder %s32, 1
      %p139 = scmp.ne.s32.totalorder %s134, %s136
      %p140 = scmp.eq.s32.totalorder %s32, 0
      %p141 = por %p139, %p140
      %p142 = scmp.ne.s32.totalorder %s134, %s136
      %p143 = scmp.eq.s32.totalorder %s37, 1
      %p144 = por %p142, %p143
      %p145 = scmp.ne.s32.totalorder %s136, %s137
      %p146 = scmp.eq.s32.totalorder %s37, 0
      %p147 = por %p145, %p146
      %p148 = scmp.ne.s32.totalorder %s136, %s137
      %p149 = scmp.eq.s32.totalorder %s38, 1
      %p150 = por %p148, %p149
      %p152 = scmp.ne.s32.totalorder %s137, %s151
      %p153 = scmp.eq.s32.totalorder %s38, 0
      %p154 = por %p152, %p153
      %s156 = sadd.s32 %s155, 1
      %p159 = scmp.eq.s32.totalorder %s32, 1
      %p160 = scmp.ne.s32.totalorder %s155, %s157
      %p161 = scmp.eq.s32.totalorder %s32, 0
      %p162 = por %p160, %p161
      %p163 = scmp.ne.s32.totalorder %s155, %s157
      %p164 = scmp.eq.s32.totalorder %s37, 1
      %p165 = por %p163, %p164
      %p166 = scmp.ne.s32.totalorder %s157, %s158
      %p167 = scmp.eq.s32.totalorder %s37, 0
      %p168 = por %p166, %p167
      %p169 = scmp.ne.s32.totalorder %s157, %s158
      %p170 = scmp.eq.s32.totalorder %s38, 1
      %p171 = por %p169, %p170
      %p173 = scmp.ne.s32.totalorder %s158, %s172
      %p174 = scmp.eq.s32.totalorder %s38, 0
      %p175 = por %p173, %p174
      %s177 = sadd.s32 %s176, 1
      %p180 = scmp.eq.s32.totalorder %s32, 1
      %p181 = scmp.ne.s32.totalorder %s176, %s178
      %p182 = scmp.eq.s32.totalorder %s32, 0
      %p183 = por %p181, %p182
      %p184 = scmp.ne.s32.totalorder %s176, %s178
      %p185 = scmp.eq.s32.totalorder %s37, 1
      %p186 = por %p184, %p185
      %p187 = scmp.ne.s32.totalorder %s178, %s179
      %p188 = scmp.eq.s32.totalorder %s37, 0
      %p189 = por %p187, %p188
      %p190 = scmp.ne.s32.totalorder %s178, %s179
      %p191 = scmp.eq.s32.totalorder %s38, 1
      %p192 = por %p190, %p191
      %p194 = scmp.ne.s32.totalorder %s179, %s193
      %p195 = scmp.eq.s32.totalorder %s38, 0
      %p196 = por %p194, %p195
      %s198 = sadd.s32 %s197, 1
      %p201 = scmp.eq.s32.totalorder %s32, 1
      %p202 = scmp.ne.s32.totalorder %s197, %s199
      %p203 = scmp.eq.s32.totalorder %s32, 0
      %p204 = por %p202, %p203
      %p205 = scmp.ne.s32.totalorder %s197, %s199
      %p206 = scmp.eq.s32.totalorder %s37, 1
      %p207 = por %p205, %p206
      %p208 = scmp.ne.s32.totalorder %s199, %s200
      %p209 = scmp.eq.s32.totalorder %s37, 0
      %p210 = por %p208, %p209
      %p211 = scmp.ne.s32.totalorder %s199, %s200
      %p212 = scmp.eq.s32.totalorder %s38, 1
      %p213 = por %p211, %p212
      %p215 = scmp.ne.s32.totalorder %s200, %s214
      %p216 = scmp.eq.s32.totalorder %s38, 0
      %p217 = por %p215, %p216
      %s219 = sadd.s32 %s218, 1
      %p222 = scmp.eq.s32.totalorder %s32, 1
      %p223 = scmp.ne.s32.totalorder %s218, %s220
      %p224 = scmp.eq.s32.totalorder %s32, 0
      %p225 = por %p223, %p224
      %p226 = scmp.ne.s32.totalorder %s218, %s220
      %p227 = scmp.eq.s32.totalorder %s37, 1
      %p228 = por %p226, %p227
      %p229 = scmp.ne.s32.totalorder %s220, %s221
      %p230 = scmp.eq.s32.totalorder %s37, 0
      %p231 = por %p229, %p230
      %p232 = scmp.ne.s32.totalorder %s220, %s221
      %p233 = scmp.eq.s32.totalorder %s38, 1
      %p234 = por %p232, %p233
      %p236 = scmp.ne.s32.totalorder %s221, %s235
      %p237 = scmp.eq.s32.totalorder %s38, 0
      %p238 = por %p236, %p237
      %s240 = sadd.s32 %s239, 1
      %p243 = scmp.eq.s32.totalorder %s32, 1
      %p244 = scmp.ne.s32.totalorder %s239, %s241
      %p245 = scmp.eq.s32.totalorder %s32, 0
      %p246 = por %p244, %p245
      %p247 = scmp.ne.s32.totalorder %s239, %s241
      %p248 = scmp.eq.s32.totalorder %s37, 1
      %p249 = por %p247, %p248
      %p250 = scmp.ne.s32.totalorder %s241, %s242
      %p251 = scmp.eq.s32.totalorder %s37, 0
      %p252 = por %p250, %p251
      %p253 = scmp.ne.s32.totalorder %s241, %s242
      %p254 = scmp.eq.s32.totalorder %s38, 1
      %p255 = por %p253, %p254
      %p257 = scmp.ne.s32.totalorder %s242, %s256
      %p258 = scmp.eq.s32.totalorder %s38, 0
      %p259 = por %p257, %p258
      %s261 = sadd.s32 %s260, 1
      %p264 = scmp.eq.s32.totalorder %s32, 1
      %p265 = scmp.ne.s32.totalorder %s260, %s262
      %p266 = scmp.eq.s32.totalorder %s32, 0
      %p267 = por %p265, %p266
      %p268 = scmp.ne.s32.totalorder %s260, %s262
      %p269 = scmp.eq.s32.totalorder %s37, 1
      %p270 = por %p268, %p269
      %p271 = scmp.ne.s32.totalorder %s262, %s263
      %p272 = scmp.eq.s32.totalorder %s37, 0
      %p273 = por %p271, %p272
      %p274 = scmp.ne.s32.totalorder %s262, %s263
      %p275 = scmp.eq.s32.totalorder %s38, 1
      %p276 = por %p274, %p275
      %p278 = scmp.ne.s32.totalorder %s263, %s277
      %p279 = scmp.eq.s32.totalorder %s38, 0
      %p280 = por %p278, %p279
      %s282 = sadd.s32 %s281, 1
      %p285 = scmp.eq.s32.totalorder %s32, 1
      %p286 = scmp.ne.s32.totalorder %s281, %s283
      %p287 = scmp.eq.s32.totalorder %s32, 0
      %p288 = por %p286, %p287
      %p289 = scmp.ne.s32.totalorder %s281, %s283
      %p290 = scmp.eq.s32.totalorder %s37, 1
      %p291 = por %p289, %p290
      %p292 = scmp.ne.s32.totalorder %s283, %s284
      %p293 = scmp.eq.s32.totalorder %s37, 0
      %p294 = por %p292, %p293
      %p295 = scmp.ne.s32.totalorder %s283, %s284
      %p296 = scmp.eq.s32.totalorder %s38, 1
      %p297 = por %p295, %p296
      %p299 = scmp.ne.s32.totalorder %s284, %s298
      %p300 = scmp.eq.s32.totalorder %s38, 0
      %p301 = por %p299, %p300
      %s303 = sadd.s32 %s302, 1
      %p306 = scmp.eq.s32.totalorder %s32, 1
      %p307 = scmp.ne.s32.totalorder %s302, %s304
      %p308 = scmp.eq.s32.totalorder %s32, 0
      %p309 = por %p307, %p308
      %p310 = scmp.ne.s32.totalorder %s302, %s304
      %p311 = scmp.eq.s32.totalorder %s37, 1
      %p312 = por %p310, %p311
      %p313 = scmp.ne.s32.totalorder %s304, %s305
      %p314 = scmp.eq.s32.totalorder %s37, 0
      %p315 = por %p313, %p314
      %p316 = scmp.ne.s32.totalorder %s304, %s305
      %p317 = scmp.eq.s32.totalorder %s38, 1
      %p318 = por %p316, %p317
      %p320 = scmp.ne.s32.totalorder %s305, %s319
      %p321 = scmp.eq.s32.totalorder %s38, 0
      %p322 = por %p320, %p321
      %s324 = sadd.s32 %s323, 1
      %p327 = scmp.eq.s32.totalorder %s32, 1
      %p328 = scmp.ne.s32.totalorder %s323, %s325
      %p329 = scmp.eq.s32.totalorder %s32, 0
      %p330 = por %p328, %p329
      %p331 = scmp.ne.s32.totalorder %s323, %s325
      %p332 = scmp.eq.s32.totalorder %s37, 1
      %p333 = por %p331, %p332
      %p334 = scmp.ne.s32.totalorder %s325, %s326
      %p335 = scmp.eq.s32.totalorder %s37, 0
      %p336 = por %p334, %p335
      %p337 = scmp.ne.s32.totalorder %s325, %s326
      %p338 = scmp.eq.s32.totalorder %s38, 1
      %p339 = por %p337, %p338
      %p341 = scmp.ne.s32.totalorder %s326, %s340
      %p342 = scmp.eq.s32.totalorder %s38, 0
      %p343 = por %p341, %p342
      %s344 = ssub.s32 %s32, %s39
      %p345 = scmp.eq.s32.totalorder %s344, 0
      %s347 = sadd.s32 %s346, 1
      %s348 = scalar_select %p345, %s346, %s347
      %p351 = pneg %p345
      %p352 = scmp.eq.s32.totalorder %s32, 1
      %p353 = por %p351, %p352
      %p354 = scmp.ne.s32.totalorder %s346, %s349
      %p355 = scmp.eq.s32.totalorder %s32, 0
      %p356 = por %p354, %p355
      %p357 = scmp.ne.s32.totalorder %s346, %s349
      %p358 = scmp.eq.s32.totalorder %s37, 1
      %p359 = por %p357, %p358
      %p360 = scmp.ne.s32.totalorder %s349, %s350
      %p361 = scmp.eq.s32.totalorder %s37, 0
      %p362 = por %p360, %p361
      %p363 = scmp.ne.s32.totalorder %s349, %s350
      %p364 = scmp.eq.s32.totalorder %s38, 1
      %p365 = por %p363, %p364
      %p367 = scmp.ne.s32.totalorder %s350, %s366
      %p368 = scmp.eq.s32.totalorder %s38, 0
      %p369 = por %p367, %p368
      %p370 = scmp.le.s32.totalorder 1, %s32
      %p371 = scmp.lt.s32.totalorder %s32, 3
      %p372 = pnand %p370, %p371
      %p373 = pneg %p372
      // Predicated region
      $region9: #{tpu_custom_call.1} parent=5 // pred_check
        _
      $region10: #{tpu_custom_call.1} parent=5 // pred_check_branch
        %375 = sbr.rel (%p372) target = $region12
      $region11: #{tpu_custom_call.1} parent=5 // pred_region
        %s376 = ssub.s32 %s32, 1
        // Predicated region
        $region13: #{tpu_custom_call.1} parent=11 // pred_check
          %p377 = pneg %p105
        $region14: #{tpu_custom_call.1} parent=11 // pred_check_branch
          %379 = sbr.rel (%p377) target = $region16
        $region15: #{tpu_custom_call.1} parent=11 // pred_region
          _
        $region16: #{tpu_custom_call.1} parent=11 // pred_fallthru
          _
        // Predicated region
        $region17: #{tpu_custom_call.1} parent=11 // pred_check
          %p380 = pneg %p126
        $region18: #{tpu_custom_call.1} parent=11 // pred_check_branch
          %382 = sbr.rel (%p380) target = $region20
        $region19: #{tpu_custom_call.1} parent=11 // pred_region
          _
        $region20: #{tpu_custom_call.1} parent=11 // pred_fallthru
          _
        // Predicated region
        $region21: #{tpu_custom_call.1} parent=11 // pred_check
          %p383 = pneg %p147
        $region22: #{tpu_custom_call.1} parent=11 // pred_check_branch
          %385 = sbr.rel (%p383) target = $region24
        $region23: #{tpu_custom_call.1} parent=11 // pred_region
          %s387 = ssub.s32 16, 16
          %388 = vsyncadd [#allocation6], %s387
          %s390 = sshll.u32 [#allocation7], 4
          %s391 = int_to_ptr.vmem [resolvable:$true] %s390
          %393 = dma.hbm_to_vmem [thread:$0]  %s4, 16, %s391, [#allocation6]
        $region24: #{tpu_custom_call.1} parent=11 // pred_fallthru
          _
        // Predicated region
        $region25: #{tpu_custom_call.1} parent=11 // pred_check
          %p394 = pneg %p168
        $region26: #{tpu_custom_call.1} parent=11 // pred_check_branch
          %396 = sbr.rel (%p394) target = $region28
        $region27: #{tpu_custom_call.1} parent=11 // pred_region
          %s398 = ssub.s32 16, 16
          %399 = vsyncadd [#allocation9], %s398
          %s401 = sshll.u32 [#allocation8], 4
          %s402 = int_to_ptr.vmem [resolvable:$true] %s401
          %404 = dma.hbm_to_vmem [thread:$0]  %s5, 16, %s402, [#allocation9]
        $region28: #{tpu_custom_call.1} parent=11 // pred_fallthru
          _
        // Predicated region
        $region29: #{tpu_custom_call.1} parent=11 // pred_check
          %p405 = pneg %p189
        $region30: #{tpu_custom_call.1} parent=11 // pred_check_branch
          %407 = sbr.rel (%p405) target = $region32
        $region31: #{tpu_custom_call.1} parent=11 // pred_region
          %s409 = ssub.s32 256, 256
          %410 = vsyncadd [#allocation9], %s409
          %s411 = sshll.u32 [#allocation10], 4
          %s412 = int_to_ptr.vmem [resolvable:$true] %s411
          %417 = dma.hbm_to_vmem [thread:$0]  %s6, 256, %s412, [#allocation9], 64, 64, 4
        $region32: #{tpu_custom_call.1} parent=11 // pred_fallthru
          _
        // Predicated region
        $region33: #{tpu_custom_call.1} parent=11 // pred_check
          %p418 = pneg %p210
        $region34: #{tpu_custom_call.1} parent=11 // pred_check_branch
          %420 = sbr.rel (%p418) target = $region36
        $region35: #{tpu_custom_call.1} parent=11 // pred_region
          %s422 = ssub.s32 16, 16
          %423 = vsyncadd [#allocation12], %s422
          %s425 = sshll.u32 [#allocation11], 4
          %s426 = int_to_ptr.vmem [resolvable:$true] %s425
          %428 = dma.hbm_to_vmem [thread:$0]  %s7, 16, %s426, [#allocation12]
        $region36: #{tpu_custom_call.1} parent=11 // pred_fallthru
          _
        // Predicated region
        $region37: #{tpu_custom_call.1} parent=11 // pred_check
          %p429 = pneg %p231
        $region38: #{tpu_custom_call.1} parent=11 // pred_check_branch
          %431 = sbr.rel (%p429) target = $region40
        $region39: #{tpu_custom_call.1} parent=11 // pred_region
          %s433 = ssub.s32 256, 256
          %434 = vsyncadd [#allocation12], %s433
          %s435 = sshll.u32 [#allocation13], 4
          %s436 = int_to_ptr.vmem [resolvable:$true] %s435
          %441 = dma.hbm_to_vmem [thread:$0]  %s8, 256, %s436, [#allocation12], 64, 64, 4
        $region40: #{tpu_custom_call.1} parent=11 // pred_fallthru
          _
        // Predicated region
        $region41: #{tpu_custom_call.1} parent=11 // pred_check
          %p442 = pneg %p252
        $region42: #{tpu_custom_call.1} parent=11 // pred_check_branch
          %444 = sbr.rel (%p442) target = $region44
        $region43: #{tpu_custom_call.1} parent=11 // pred_region
          %s446 = ssub.s32 16, 16
          %447 = vsyncadd [#allocation15], %s446
          %s449 = sshll.u32 [#allocation14], 4
          %s450 = int_to_ptr.vmem [resolvable:$true] %s449
          %452 = dma.hbm_to_vmem [thread:$0]  %s9, 16, %s450, [#allocation15]
        $region44: #{tpu_custom_call.1} parent=11 // pred_fallthru
          _
        // Predicated region
        $region45: #{tpu_custom_call.1} parent=11 // pred_check
          %p453 = pneg %p273
        $region46: #{tpu_custom_call.1} parent=11 // pred_check_branch
          %455 = sbr.rel (%p453) target = $region48
        $region47: #{tpu_custom_call.1} parent=11 // pred_region
          _
        $region48: #{tpu_custom_call.1} parent=11 // pred_fallthru
          _
        // Predicated region
        $region49: #{tpu_custom_call.1} parent=11 // pred_check
          %p456 = pneg %p294
        $region50: #{tpu_custom_call.1} parent=11 // pred_check_branch
          %458 = sbr.rel (%p456) target = $region52
        $region51: #{tpu_custom_call.1} parent=11 // pred_region
          _
        $region52: #{tpu_custom_call.1} parent=11 // pred_fallthru
          _
        // Predicated region
        $region53: #{tpu_custom_call.1} parent=11 // pred_check
          %p459 = pneg %p315
        $region54: #{tpu_custom_call.1} parent=11 // pred_check_branch
          %461 = sbr.rel (%p459) target = $region56
        $region55: #{tpu_custom_call.1} parent=11 // pred_region
          %s463 = ssub.s32 256, 256
          %464 = vsyncadd [#allocation15], %s463
          %s465 = sshll.u32 [#allocation16], 4
          %s466 = int_to_ptr.vmem [resolvable:$true] %s465
          %471 = dma.hbm_to_vmem [thread:$0]  %s12, 256, %s466, [#allocation15], 64, 64, 4
        $region56: #{tpu_custom_call.1} parent=11 // pred_fallthru
          _
        // Predicated region
        $region57: #{tpu_custom_call.1} parent=11 // pred_check
          %p472 = pneg %p336
        $region58: #{tpu_custom_call.1} parent=11 // pred_check_branch
          %474 = sbr.rel (%p472) target = $region60
        $region59: #{tpu_custom_call.1} parent=11 // pred_region
          _
        $region60: #{tpu_custom_call.1} parent=11 // pred_fallthru
          _
      $region12: #{tpu_custom_call.1} parent=5 // pred_fallthru
        _
      %p475 = scmp.lt.s32.totalorder %s32, 2
      // Predicated region
      $region61: #{tpu_custom_call.1} parent=5 // pred_check
        %p476 = pneg %p475
      $region62: #{tpu_custom_call.1} parent=5 // pred_check_branch
        %478 = sbr.rel (%p476) target = $region64
      $region63: #{tpu_custom_call.1} parent=5 // pred_region
        // Predicated region
        $region65: #{tpu_custom_call.1} parent=63 // pred_check
          %p479 = pneg %p52
        $region66: #{tpu_custom_call.1} parent=63 // pred_check_branch
          %481 = sbr.rel (%p479) target = $region68
        $region67: #{tpu_custom_call.1} parent=63 // pred_region
          %s482 = sand.u32 %s42, 1
          %s483 = scalar_lea.sflag [#allocation3], %s482
          %s484 = sand.u32 %s42, 1
          %s485 = smul.addr %s484, 16
          %s486 = scalar_lea.vmem [#allocation2], %s485
          %s488 = ssub.s32 256, 256
          %489 = vsyncadd %s483, %s488
          %s490 = smul.addr %s32, 2
          %s491 = smul.addr %s490, 128
          %s492 = scalar_lea.hbm %s0, %s491
          %s493 = sshll.u32 %s486, 4
          %s494 = int_to_ptr.vmem [resolvable:$true] %s493
          %499 = dma.hbm_to_vmem [thread:$0]  %s492, 256, %s494, %s483, 128, 128, 8
        $region68: #{tpu_custom_call.1} parent=63 // pred_fallthru
          _
        // Predicated region
        $region69: #{tpu_custom_call.1} parent=63 // pred_check
          %p500 = pneg %p78
        $region70: #{tpu_custom_call.1} parent=63 // pred_check_branch
          %502 = sbr.rel (%p500) target = $region72
        $region71: #{tpu_custom_call.1} parent=63 // pred_region
          %s503 = sand.u32 %s32, 1
          %s504 = scalar_lea.sflag [#allocation6], %s503
          %s505 = sand.u32 %s68, 1
          %s506 = smul.addr %s505, 8
          %s507 = scalar_lea.vmem [#allocation5], %s506
          %s509 = ssub.s32 128, 128
          %510 = vsyncadd %s504, %s509
          %s511 = smul.addr %s32, 128
          %s512 = scalar_lea.hbm %s1, %s511
          %s514 = sshll.u32 %s507, 4
          %s515 = int_to_ptr.vmem [resolvable:$true] %s514
          %517 = dma.hbm_to_vmem [thread:$0]  %s512, 128, %s515, %s504
        $region72: #{tpu_custom_call.1} parent=63 // pred_fallthru
          _
      $region64: #{tpu_custom_call.1} parent=5 // pred_fallthru
        _
      %p518 = scmp.le.s32.totalorder 1, %s32
      %p519 = scmp.lt.s32.totalorder %s32, 3
      %p520 = pnand %p518, %p519
      %p521 = pneg %p520
      // Predicated region
      $region73: #{tpu_custom_call.1} parent=5 // pred_check
        _
      $region74: #{tpu_custom_call.1} parent=5 // pred_check_branch
        %523 = sbr.rel (%p520) target = $region76
      $region75: #{tpu_custom_call.1} parent=5 // pred_region
        %s524 = ssub.s32 %s32, 1
        %s525 = sand.u32 %s45, 1
        %s526 = scalar_lea.sflag [#allocation3], %s525
        %s527 = sand.u32 %s45, 1
        %s528 = smul.addr %s527, 16
        %s529 = scalar_lea.vmem [#allocation2], %s528
        // Predicated region
        $region77: #{tpu_custom_call.1} parent=75 // pred_check
          %p530 = pneg %p58
        $region78: #{tpu_custom_call.1} parent=75 // pred_check_branch
          %532 = sbr.rel (%p530) target = $region80
        $region79: #{tpu_custom_call.1} parent=75 // pred_region
          %533 = dma.done %s526, 256
        $region80: #{tpu_custom_call.1} parent=75 // pred_fallthru
          _
        %s534 = sand.u32 %s37, 1
        %s535 = scalar_lea.sflag [#allocation6], %s534
        %s536 = sand.u32 %s71, 1
        %s537 = smul.addr %s536, 8
        %s538 = scalar_lea.vmem [#allocation5], %s537
        // Predicated region
        $region81: #{tpu_custom_call.1} parent=75 // pred_check
          %p539 = pneg %p84
        $region82: #{tpu_custom_call.1} parent=75 // pred_check_branch
          %541 = sbr.rel (%p539) target = $region84
        $region83: #{tpu_custom_call.1} parent=75 // pred_region
          %542 = dma.done %s535, 128
        $region84: #{tpu_custom_call.1} parent=75 // pred_fallthru
          _
        // Predicated region
        $region85: #{tpu_custom_call.1} parent=75 // pred_check
          %p543 = pneg %p147
        $region86: #{tpu_custom_call.1} parent=75 // pred_check_branch
          %545 = sbr.rel (%p543) target = $region88
        $region87: #{tpu_custom_call.1} parent=75 // pred_region
          %546 = dma.done [#allocation6], 16
        $region88: #{tpu_custom_call.1} parent=75 // pred_fallthru
          _
        // Predicated region
        $region89: #{tpu_custom_call.1} parent=75 // pred_check
          %p547 = pneg %p168
        $region90: #{tpu_custom_call.1} parent=75 // pred_check_branch
          %549 = sbr.rel (%p547) target = $region92
        $region91: #{tpu_custom_call.1} parent=75 // pred_region
          %550 = dma.done [#allocation9], 16
        $region92: #{tpu_custom_call.1} parent=75 // pred_fallthru
          _
        // Predicated region
        $region93: #{tpu_custom_call.1} parent=75 // pred_check
          %p551 = pneg %p189
        $region94: #{tpu_custom_call.1} parent=75 // pred_check_branch
          %553 = sbr.rel (%p551) target = $region96
        $region95: #{tpu_custom_call.1} parent=75 // pred_region
          %554 = dma.done [#allocation9], 256
        $region96: #{tpu_custom_call.1} parent=75 // pred_fallthru
          _
        // Predicated region
        $region97: #{tpu_custom_call.1} parent=75 // pred_check
          %p555 = pneg %p210
        $region98: #{tpu_custom_call.1} parent=75 // pred_check_branch
          %557 = sbr.rel (%p555) target = $region100
        $region99: #{tpu_custom_call.1} parent=75 // pred_region
          %558 = dma.done [#allocation12], 16
        $region100: #{tpu_custom_call.1} parent=75 // pred_fallthru
          _
        // Predicated region
        $region101: #{tpu_custom_call.1} parent=75 // pred_check
          %p559 = pneg %p231
        $region102: #{tpu_custom_call.1} parent=75 // pred_check_branch
          %561 = sbr.rel (%p559) target = $region104
        $region103: #{tpu_custom_call.1} parent=75 // pred_region
          %562 = dma.done [#allocation12], 256
        $region104: #{tpu_custom_call.1} parent=75 // pred_fallthru
          _
        // Predicated region
        $region105: #{tpu_custom_call.1} parent=75 // pred_check
          %p563 = pneg %p252
        $region106: #{tpu_custom_call.1} parent=75 // pred_check_branch
          %565 = sbr.rel (%p563) target = $region108
        $region107: #{tpu_custom_call.1} parent=75 // pred_region
          %566 = dma.done [#allocation15], 16
        $region108: #{tpu_custom_call.1} parent=75 // pred_fallthru
          _
        // Predicated region
        $region109: #{tpu_custom_call.1} parent=75 // pred_check
          %p567 = pneg %p315
        $region110: #{tpu_custom_call.1} parent=75 // pred_check_branch
          %569 = sbr.rel (%p567) target = $region112
        $region111: #{tpu_custom_call.1} parent=75 // pred_region
          %570 = dma.done [#allocation15], 256
        $region112: #{tpu_custom_call.1} parent=75 // pred_fallthru
          _
        %s571 = sand.u32 %s45, 1
        %s572 = scalar_lea.sflag [#allocation3], %s571
        %s573 = sand.u32 %s45, 1
        %s574 = smul.addr %s573, 16
        %s575 = scalar_lea.vmem [#allocation2], %s574
        %p576 = pneg %p58
        %p577 = pneg %p55
        %s578 = sand.u32 %s37, 1
        %s579 = scalar_lea.sflag [#allocation6], %s578
        %s580 = sand.u32 %s71, 1
        %s581 = smul.addr %s580, 8
        %s582 = scalar_lea.vmem [#allocation5], %s581
        %p583 = pneg %p84
        %p584 = pneg %p81
        %p585 = pneg %p105
        %p586 = pneg %p102
        %p587 = pneg %p126
        %p588 = pneg %p123
        %p589 = pneg %p147
        %p590 = pneg %p144
        %p591 = pneg %p168
        %p592 = pneg %p165
        %p593 = pneg %p189
        %p594 = pneg %p186
        %p595 = pneg %p210
        %p596 = pneg %p207
        %p597 = pneg %p231
        %p598 = pneg %p228
        %p599 = pneg %p252
        %p600 = pneg %p249
        %p601 = pneg %p273
        %p602 = pneg %p270
        %p603 = pneg %p294
        %p604 = pneg %p291
        %p605 = pneg %p315
        %p606 = pneg %p312
        %p607 = pneg %p336
        %p608 = pneg %p333
        %p609 = pneg %p362
        %p610 = pneg %p359
        %s611 = sand.u32 %s349, 1
        %s612 = scalar_lea.sflag [#allocation4], %s611
        %s613 = sand.u32 %s349, 1
        %s614 = smul.addr %s613, 8
        %s615 = scalar_lea.vmem [#allocation17], %s614
        %v617 = vld [vmem:[%s2] sm:$0x1]
        %v618 = vld [vmem:[%s3] sm:$0x1]
        %v619 = vld [vmem:[#allocation7] sm:$0x1]
        %v620 = vld [vmem:[#allocation8] sm:$0x1]
        %v621 = vld [vmem:[%s529] sm:$0xff]
        %v622 = vld [vmem:[%s529 + $0x8] sm:$0xff]
        %v623 = vld [vmem:[%s538] sm:$0xff]
        %vm624 = vcmask 261120
        %v625 = vsel %vm624, %v621, 0.0
        %626 = vadd.xlane.f32.xlu0 %v625
        %v627 = vpop.xlane.xlu0 %626
        %v628 = vsel %vm624, %v622, 0.0
        %629 = vadd.xlane.f32.xlu0 %v628
        %v630 = vpop.xlane.xlu0 %629
        %v631 = vrcp.pop 32.0
        %v632 = vmul.f32 %v627, %v631
        %v633 = vmul.f32 %v630, %v631
        %v634 = vsub.f32 %v621, %v632
        %v635 = vsub.f32 %v622, %v633
        %v636 = vmul.f32 %v634, %v634
        %v637 = vmul.f32 %v635, %v635
        %v638 = vsel %vm624, %v636, 0.0
        %639 = vadd.xlane.f32.xlu0 %v638
        %v640 = vpop.xlane.xlu0 %639
        %v641 = vsel %vm624, %v637, 0.0
        %642 = vadd.xlane.f32.xlu0 %v641
        %v643 = vpop.xlane.xlu0 %642
        %v644 = vmul.f32 %v640, %v631
        %v645 = vmul.f32 %v643, %v631
        %v646 = vadd.f32 %v644, 1e-05
        %v647 = vadd.f32 %v645, 1e-05
        %v648 = vrsqrt.pop %v646
        %v649 = vrsqrt.pop %v647
        %v650 = vmul.f32 %v634, %v648
        %v651 = vmul.f32 %v635, %v649
        %v653 = vlaneseq
        %v654 = vshrl.u32 %v653, 7
        %v655 = vsub.s32 0, %v654
        %v656 = vrot.slane %v617, %v655
        %v658 = vmul.f32 %v650, %v656
        %v659 = vmul.f32 %v651, %v656
        %v661 = vlaneseq
        %v662 = vshrl.u32 %v661, 7
        %v663 = vsub.s32 0, %v662
        %v664 = vrot.slane %v618, %v663
        %v666 = vadd.f32 %v658, %v664
        %v667 = vadd.f32 %v659, %v664
        %v668 = vsel %vm624, %v623, 0.0
        %669 = vadd.xlane.f32.xlu0 %v668
        %v670 = vpop.xlane.xlu0 %669
        %v671 = vmul.f32 %v670, %v631
        %v672 = vsub.f32 %v623, %v671
        %v673 = vmul.f32 %v672, %v672
        %v674 = vsel %vm624, %v673, 0.0
        %675 = vadd.xlane.f32.xlu0 %v674
        %v676 = vpop.xlane.xlu0 %675
        %v677 = vmul.f32 %v676, %v631
        %v678 = vadd.f32 %v677, 1e-05
        %v679 = vrsqrt.pop %v678
        %v680 = vmul.f32 %v672, %v679
        %v682 = vlaneseq
        %v683 = vshrl.u32 %v682, 7
        %v684 = vsub.s32 0, %v683
        %v685 = vrot.slane %v619, %v684
        %v687 = vmul.f32 %v680, %v685
        %v689 = vlaneseq
        %v690 = vshrl.u32 %v689, 7
        %v691 = vsub.s32 0, %v690
        %v692 = vrot.slane %v620, %v691
        %v694 = vadd.f32 %v687, %v692
        %v695 = vpack.c.bf16 %v694, %v694
        %v696 = vpack.c.bf16 %v667, %v666
        %v697 = vld [vmem:[#allocation10] sm:$0xf]
        %v698 = vld [vmem:[#allocation10 + $0x4] sm:$0xf]
        %v699 = vld [vmem:[#allocation10 + $0x8] sm:$0xf]
        %v700 = vld [vmem:[#allocation10 + $0xc] sm:$0xf]
        %v701 = vld [vmem:[#allocation11] sm:$0x1]
        %v703 = vlaneseq
        %v704 = vshrl.u32 %v703, 7
        %v705 = vsub.s32 0, %v704
        %v706 = vrot.slane %v701, %v705
        %v712 = vunpack.c.l.b16 %v697
        %v713 = vunpack.c.l.b16 %v698
        %v714 = vunpack.c.l.b16 %v699
        %v715 = vunpack.c.l.b16 %v700
        %v716 = vpack.c.b16 %v713, %v712
        %v717 = vpack.c.b16 %v715, %v714
        %v721 = vsel %vm624, %v695, 0
        %723 = vmatprep.subr.bf16.mxu0 0
        %724 = vmatpush1.bf16.msra.mxu0 0
        %725 = vmatprep.subr.bf16.mxu0 0
        %726 = vmatpush1.bf16.msra.mxu0 0
        %727 = vmatprep.subr.bf16.mxu0 0
        %728 = vmatpush1.bf16.msra.mxu0 0
        %729 = vmatprep.subr.bf16.mxu0 0
        %730 = vmatpush1.bf16.msra.mxu0 0
        %731 = vmatprep.subr.bf16.mxu0 0
        %732 = vmatpush1.bf16.msra.mxu0 0
        %733 = vmatprep.subr.bf16.mxu0 0
        %734 = vmatpush1.bf16.msra.mxu0 0
        %735 = vmatprep.subr.bf16.mxu0 0
        %736 = vmatpush1.bf16.msra.mxu0 %v717
        %737 = vmatprep.subr.bf16.mxu0 0
        %738 = vmatpush1.bf16.msra.mxu0 %v716
        %739 = vmatprep.subr.bf16.mxu0 0
        %740 = vmatpush2.bf16.msra.mxu0 0
        %741 = vmatprep.subr.bf16.mxu0 0
        %742 = vmatpush2.bf16.msra.mxu0 0
        %743 = vmatprep.subr.bf16.mxu0 0
        %744 = vmatpush2.bf16.msra.mxu0 0
        %745 = vmatprep.subr.bf16.mxu0 0
        %746 = vmatpush2.bf16.msra.mxu0 0
        %747 = vmatprep.subr.bf16.mxu0 0
        %748 = vmatpush2.bf16.msra.mxu0 0
        %749 = vmatprep.subr.bf16.mxu0 0
        %750 = vmatpush2.bf16.msra.mxu0 0
        %751 = vmatprep.subr.bf16.mxu0 0
        %752 = vmatpush2.bf16.msra.mxu0 0
        %753 = vmatprep.subr.bf16.mxu0 0
        %754 = vmatpush2.bf16.msra.mxu0 0
        %755 = vmatprep.mubr.bf16.mxu0 0
        %756 = vmatmul.mubr.bf16.gmra.mxu0 %v721
        %v757 = vpop.f32.mrf.mxu0
        %v758 = vadd.f32 %v706, %v757
        %v759 = vpop.f32.mrf.mxu0
        %v760 = vpop.f32.mrf.mxu0
        %v761 = vpop.f32.mrf.mxu0
        %762 = vdwg.mxu0
        %v763 = vld [vmem:[#allocation13] sm:$0xf]
        %v764 = vld [vmem:[#allocation13 + $0x4] sm:$0xf]
        %v765 = vld [vmem:[#allocation13 + $0x8] sm:$0xf]
        %v766 = vld [vmem:[#allocation13 + $0xc] sm:$0xf]
        %v767 = vld [vmem:[#allocation14] sm:$0x1]
        %v769 = vlaneseq
        %v770 = vshrl.u32 %v769, 7
        %v771 = vsub.s32 0, %v770
        %v772 = vrot.slane %v767, %v771
        %v778 = vunpack.c.l.b16 %v763
        %v779 = vunpack.c.l.b16 %v764
        %v780 = vunpack.c.l.b16 %v765
        %v781 = vunpack.c.l.b16 %v766
        %v782 = vpack.c.b16 %v779, %v778
        %v783 = vpack.c.b16 %v781, %v780
        %v787 = vsel %vm624, %v696, 0
        %789 = vmatprep.subr.bf16.mxu0 0
        %790 = vmatpush1.bf16.msra.mxu0 0
        %791 = vmatprep.subr.bf16.mxu0 0
        %792 = vmatpush1.bf16.msra.mxu0 0
        %793 = vmatprep.subr.bf16.mxu0 0
        %794 = vmatpush1.bf16.msra.mxu0 0
        %795 = vmatprep.subr.bf16.mxu0 0
        %796 = vmatpush1.bf16.msra.mxu0 0
        %797 = vmatprep.subr.bf16.mxu0 0
        %798 = vmatpush1.bf16.msra.mxu0 0
        %799 = vmatprep.subr.bf16.mxu0 0
        %800 = vmatpush1.bf16.msra.mxu0 0
        %801 = vmatprep.subr.bf16.mxu0 0
        %802 = vmatpush1.bf16.msra.mxu0 %v783
        %803 = vmatprep.subr.bf16.mxu0 0
        %804 = vmatpush1.bf16.msra.mxu0 %v782
        %805 = vmatprep.subr.bf16.mxu0 0
        %806 = vmatpush2.bf16.msra.mxu0 0
        %807 = vmatprep.subr.bf16.mxu0 0
        %808 = vmatpush2.bf16.msra.mxu0 0
        %809 = vmatprep.subr.bf16.mxu0 0
        %810 = vmatpush2.bf16.msra.mxu0 0
        %811 = vmatprep.subr.bf16.mxu0 0
        %812 = vmatpush2.bf16.msra.mxu0 0
        %813 = vmatprep.subr.bf16.mxu0 0
        %814 = vmatpush2.bf16.msra.mxu0 0
        %815 = vmatprep.subr.bf16.mxu0 0
        %816 = vmatpush2.bf16.msra.mxu0 0
        %817 = vmatprep.subr.bf16.mxu0 0
        %818 = vmatpush2.bf16.msra.mxu0 0
        %819 = vmatprep.subr.bf16.mxu0 0
        %820 = vmatpush2.bf16.msra.mxu0 0
        %821 = vmatprep.mubr.bf16.mxu0 0
        %822 = vmatmul.mubr.bf16.gmra.mxu0 %v787
        %v823 = vpop.f32.mrf.mxu0
        %v824 = vadd.f32 %v772, %v823
        %v825 = vpop.f32.mrf.mxu0
        %v826 = vpop.f32.mrf.mxu0
        %v827 = vadd.f32 %v772, %v826
        %v828 = vpop.f32.mrf.mxu0
        %829 = vmatprep.mubr.bf16.mxu0 0
        %830 = vmatmul.mubr.bf16.gmra.mxu0 %v721
        %v831 = vpop.f32.mrf.mxu0
        %v832 = vadd.f32 %v772, %v831
        %v833 = vpop.f32.mrf.mxu0
        %v834 = vpop.f32.mrf.mxu0
        %v835 = vpop.f32.mrf.mxu0
        %836 = vdwg.mxu0
        %v837 = vld [vmem:[%s10] sm:$0xf]
        %v838 = vld [vmem:[%s10 + $0x4] sm:$0xf]
        %v839 = vld [vmem:[%s10 + $0x8] sm:$0xf]
        %v840 = vld [vmem:[%s10 + $0xc] sm:$0xf]
        %v841 = vld [vmem:[%s11] sm:$0x1]
        %v843 = vlaneseq
        %v844 = vshrl.u32 %v843, 7
        %v845 = vsub.s32 0, %v844
        %v846 = vrot.slane %v841, %v845
        %v852 = vunpack.c.l.b16 %v837
        %v853 = vunpack.c.l.b16 %v838
        %v854 = vunpack.c.l.b16 %v839
        %v855 = vunpack.c.l.b16 %v840
        %v856 = vpack.c.b16 %v853, %v852
        %v857 = vpack.c.b16 %v855, %v854
        %860 = vmatprep.subr.bf16.mxu0 0
        %861 = vmatpush1.bf16.msra.mxu0 0
        %862 = vmatprep.subr.bf16.mxu0 0
        %863 = vmatpush1.bf16.msra.mxu0 0
        %864 = vmatprep.subr.bf16.mxu0 0
        %865 = vmatpush1.bf16.msra.mxu0 0
        %866 = vmatprep.subr.bf16.mxu0 0
        %867 = vmatpush1.bf16.msra.mxu0 0
        %868 = vmatprep.subr.bf16.mxu0 0
        %869 = vmatpush1.bf16.msra.mxu0 0
        %870 = vmatprep.subr.bf16.mxu0 0
        %871 = vmatpush1.bf16.msra.mxu0 0
        %872 = vmatprep.subr.bf16.mxu0 0
        %873 = vmatpush1.bf16.msra.mxu0 %v857
        %874 = vmatprep.subr.bf16.mxu0 0
        %875 = vmatpush1.bf16.msra.mxu0 %v856
        %876 = vmatprep.subr.bf16.mxu0 0
        %877 = vmatpush2.bf16.msra.mxu0 0
        %878 = vmatprep.subr.bf16.mxu0 0
        %879 = vmatpush2.bf16.msra.mxu0 0
        %880 = vmatprep.subr.bf16.mxu0 0
        %881 = vmatpush2.bf16.msra.mxu0 0
        %882 = vmatprep.subr.bf16.mxu0 0
        %883 = vmatpush2.bf16.msra.mxu0 0
        %884 = vmatprep.subr.bf16.mxu0 0
        %885 = vmatpush2.bf16.msra.mxu0 0
        %886 = vmatprep.subr.bf16.mxu0 0
        %887 = vmatpush2.bf16.msra.mxu0 0
        %888 = vmatprep.subr.bf16.mxu0 0
        %889 = vmatpush2.bf16.msra.mxu0 0
        %890 = vmatprep.subr.bf16.mxu0 0
        %891 = vmatpush2.bf16.msra.mxu0 0
        %892 = vmatprep.mubr.bf16.mxu0 0
        %893 = vmatmul.mubr.bf16.gmra.mxu0 %v787
        %v894 = vpop.f32.mrf.mxu0
        %v895 = vadd.f32 %v846, %v894
        %v896 = vpop.f32.mrf.mxu0
        %v897 = vpop.f32.mrf.mxu0
        %v898 = vadd.f32 %v846, %v897
        %v899 = vpop.f32.mrf.mxu0
        %900 = vmatprep.mubr.bf16.mxu0 0
        %901 = vmatmul.mubr.bf16.gmra.mxu0 %v721
        %v902 = vpop.f32.mrf.mxu0
        %v903 = vadd.f32 %v846, %v902
        %v904 = vpop.f32.mrf.mxu0
        %v905 = vpop.f32.mrf.mxu0
        %v906 = vpop.f32.mrf.mxu0
        %907 = vdwg.mxu0
        %v908 = vpack.c.bf16 %v758, %v758
        %v909 = vpack.c.bf16 %v827, %v824
        %v910 = vpack.c.bf16 %v832, %v832
        %v911 = vpack.c.bf16 %v898, %v895
        %v912 = vpack.c.bf16 %v903, %v903
        %vm913 = vcmask 64512
        %v915 = vsel %vm913, %v908, 0
        %v918 = vsel %vm913, %v909, 0
        %v921 = vsel %vm913, %v910, 0
        %923 = vmatprep.subr.bf16.mxu0 0
        %924 = vmatpush1.bf16.xpose.msra.mxu0 0
        %925 = vmatprep.subr.bf16.mxu0 0
        %926 = vmatpush1.bf16.xpose.msra.mxu0 0
        %927 = vmatprep.subr.bf16.mxu0 0
        %928 = vmatpush1.bf16.xpose.msra.mxu0 0
        %929 = vmatprep.subr.bf16.mxu0 0
        %930 = vmatpush1.bf16.xpose.msra.mxu0 0
        %931 = vmatprep.subr.bf16.mxu0 0
        %932 = vmatpush1.bf16.xpose.msra.mxu0 0
        %933 = vmatprep.subr.bf16.mxu0 0
        %934 = vmatpush1.bf16.xpose.msra.mxu0 0
        %935 = vmatprep.subr.bf16.mxu0 0
        %936 = vmatpush1.bf16.xpose.msra.mxu0 %v921
        %937 = vmatprep.subr.bf16.mxu0 0
        %938 = vmatpush1.bf16.xpose.msra.mxu0 %v918
        %939 = vmatprep.subr.bf16.mxu0 0
        %940 = vmatpush2.bf16.xpose.msra.mxu0 0
        %941 = vmatprep.subr.bf16.mxu0 0
        %942 = vmatpush2.bf16.xpose.msra.mxu0 0
        %943 = vmatprep.subr.bf16.mxu0 0
        %944 = vmatpush2.bf16.xpose.msra.mxu0 0
        %945 = vmatprep.subr.bf16.mxu0 0
        %946 = vmatpush2.bf16.xpose.msra.mxu0 0
        %947 = vmatprep.subr.bf16.mxu0 0
        %948 = vmatpush2.bf16.xpose.msra.mxu0 0
        %949 = vmatprep.subr.bf16.mxu0 0
        %950 = vmatpush2.bf16.xpose.msra.mxu0 0
        %951 = vmatprep.subr.bf16.mxu0 0
        %952 = vmatpush2.bf16.xpose.msra.mxu0 0
        %953 = vmatprep.subr.bf16.mxu0 0
        %954 = vmatpush2.bf16.xpose.msra.mxu0 0
        %955 = vmatprep.mubr.bf16.mxu0 0
        %956 = vmatmul.mubr.bf16.gmra.mxu0 %v915
        %v957 = vpop.f32.mrf.mxu0
        %v958 = vadd.f32 0.0, %v957
        %v959 = vpop.f32.mrf.mxu0
        %v960 = vpop.f32.mrf.mxu0
        %v961 = vpop.f32.mrf.mxu0
        %962 = vdwg.mxu0
        %vm963 = vcmask 195584
        %v964 = vsel %vm963, %v958, -inf
        %965 = vmax.xlane.f32.xlu0 %v964
        %v966 = vpop.xlane.xlu0 %965
        %v967 = vsub.f32 %v958, %v966
        %v968 = vmul.f32 %v967, 1.442695
        %v969 = vpow.pop %v968
        %v970 = vsel %vm963, %v969, 0.0
        %971 = vadd.xlane.f32.xlu0 %v970
        %v972 = vpop.xlane.xlu0 %971
        %v973 = vrcp.pop %v972
        %v974 = vmul.f32 %v969, %v973
        %v975 = vpack.c.bf16 %v974, %v974
        %v977 = vsel %vm963, %v975, 0
        %vm979 = vcmask 1043456
        %v981 = vsel %vm979, %v912, 0
        %983 = vmatprep.subr.bf16.mxu0 0
        %984 = vmatpush1.bf16.msra.mxu0 0
        %985 = vmatprep.subr.bf16.mxu0 0
        %986 = vmatpush1.bf16.msra.mxu0 0
        %987 = vmatprep.subr.bf16.mxu0 0
        %988 = vmatpush1.bf16.msra.mxu0 0
        %989 = vmatprep.subr.bf16.mxu0 0
        %990 = vmatpush1.bf16.msra.mxu0 0
        %991 = vmatprep.subr.bf16.mxu0 0
        %992 = vmatpush1.bf16.msra.mxu0 0
        %993 = vmatprep.subr.bf16.mxu0 0
        %994 = vmatpush1.bf16.msra.mxu0 0
        %995 = vmatprep.subr.bf16.mxu0 0
        %996 = vmatpush1.bf16.msra.mxu0 %v981
        %997 = vmatprep.subr.bf16.mxu0 0
        %998 = vmatpush1.bf16.msra.mxu0 %v911
        %999 = vmatprep.subr.bf16.mxu0 0
        %1000 = vmatpush2.bf16.msra.mxu0 0
        %1001 = vmatprep.subr.bf16.mxu0 0
        %1002 = vmatpush2.bf16.msra.mxu0 0
        %1003 = vmatprep.subr.bf16.mxu0 0
        %1004 = vmatpush2.bf16.msra.mxu0 0
        %1005 = vmatprep.subr.bf16.mxu0 0
        %1006 = vmatpush2.bf16.msra.mxu0 0
        %1007 = vmatprep.subr.bf16.mxu0 0
        %1008 = vmatpush2.bf16.msra.mxu0 0
        %1009 = vmatprep.subr.bf16.mxu0 0
        %1010 = vmatpush2.bf16.msra.mxu0 0
        %1011 = vmatprep.subr.bf16.mxu0 0
        %1012 = vmatpush2.bf16.msra.mxu0 0
        %1013 = vmatprep.subr.bf16.mxu0 0
        %1014 = vmatpush2.bf16.msra.mxu0 0
        %1015 = vmatprep.mubr.bf16.mxu0 0
        %1016 = vmatmul.mubr.bf16.gmra.mxu0 %v977
        %v1017 = vpop.f32.mrf.mxu0
        %v1018 = vadd.f32 0.0, %v1017
        %v1019 = vpop.f32.mrf.mxu0
        %v1020 = vpop.f32.mrf.mxu0
        %v1021 = vpop.f32.mrf.mxu0
        %1022 = vdwg.mxu0
        %1024 = vrot.lane.b32.xlu0 %v908, 120
        %v1025 = vpop.permute.xlu0 %1024
        %1028 = vrot.lane.b32.xlu0 %v909, 120
        %v1029 = vpop.permute.xlu0 %1028
        %1030 = vrot.lane.b32.xlu0 %v910, 120
        %v1031 = vpop.permute.xlu0 %1030
        %v1033 = vsel %vm913, %v1025, 0
        %v1036 = vsel %vm913, %v1029, 0
        %v1039 = vsel %vm913, %v1031, 0
        %1041 = vmatprep.subr.bf16.mxu0 0
        %1042 = vmatpush1.bf16.xpose.msra.mxu0 0
        %1043 = vmatprep.subr.bf16.mxu0 0
        %1044 = vmatpush1.bf16.xpose.msra.mxu0 0
        %1045 = vmatprep.subr.bf16.mxu0 0
        %1046 = vmatpush1.bf16.xpose.msra.mxu0 0
        %1047 = vmatprep.subr.bf16.mxu0 0
        %1048 = vmatpush1.bf16.xpose.msra.mxu0 0
        %1049 = vmatprep.subr.bf16.mxu0 0
        %1050 = vmatpush1.bf16.xpose.msra.mxu0 0
        %1051 = vmatprep.subr.bf16.mxu0 0
        %1052 = vmatpush1.bf16.xpose.msra.mxu0 0
        %1053 = vmatprep.subr.bf16.mxu0 0
        %1054 = vmatpush1.bf16.xpose.msra.mxu0 %v1039
        %1055 = vmatprep.subr.bf16.mxu0 0
        %1056 = vmatpush1.bf16.xpose.msra.mxu0 %v1036
        %1057 = vmatprep.subr.bf16.mxu0 0
        %1058 = vmatpush2.bf16.xpose.msra.mxu0 0
        %1059 = vmatprep.subr.bf16.mxu0 0
        %1060 = vmatpush2.bf16.xpose.msra.mxu0 0
        %1061 = vmatprep.subr.bf16.mxu0 0
        %1062 = vmatpush2.bf16.xpose.msra.mxu0 0
        %1063 = vmatprep.subr.bf16.mxu0 0
        %1064 = vmatpush2.bf16.xpose.msra.mxu0 0
        %1065 = vmatprep.subr.bf16.mxu0 0
        %1066 = vmatpush2.bf16.xpose.msra.mxu0 0
        %1067 = vmatprep.subr.bf16.mxu0 0
        %1068 = vmatpush2.bf16.xpose.msra.mxu0 0
        %1069 = vmatprep.subr.bf16.mxu0 0
        %1070 = vmatpush2.bf16.xpose.msra.mxu0 0
        %1071 = vmatprep.subr.bf16.mxu0 0
        %1072 = vmatpush2.bf16.xpose.msra.mxu0 0
        %1073 = vmatprep.mubr.bf16.mxu0 0
        %1074 = vmatmul.mubr.bf16.gmra.mxu0 %v1033
        %v1075 = vpop.f32.mrf.mxu0
        %v1076 = vadd.f32 0.0, %v1075
        %v1077 = vpop.f32.mrf.mxu0
        %v1078 = vpop.f32.mrf.mxu0
        %v1079 = vpop.f32.mrf.mxu0
        %1080 = vdwg.mxu0
        %v1081 = vsel %vm963, %v1076, -inf
        %1082 = vmax.xlane.f32.xlu0 %v1081
        %v1083 = vpop.xlane.xlu0 %1082
        %v1084 = vsub.f32 %v1076, %v1083
        %v1085 = vmul.f32 %v1084, 1.442695
        %v1086 = vpow.pop %v1085
        %v1087 = vsel %vm963, %v1086, 0.0
        %1088 = vadd.xlane.f32.xlu0 %v1087
        %v1089 = vpop.xlane.xlu0 %1088
        %v1090 = vrcp.pop %v1089
        %v1091 = vmul.f32 %v1086, %v1090
        %v1092 = vpack.c.bf16 %v1091, %v1091
        %1095 = vrot.lane.b32.xlu0 %v911, 120
        %v1096 = vpop.permute.xlu0 %1095
        %1097 = vrot.lane.b32.xlu0 %v912, 120
        %v1098 = vpop.permute.xlu0 %1097
        %v1101 = vsel %vm963, %v1092, 0
        %v1104 = vsel %vm979, %v1098, 0
        %1106 = vmatprep.subr.bf16.mxu0 0
        %1107 = vmatpush1.bf16.msra.mxu0 0
        %1108 = vmatprep.subr.bf16.mxu0 0
        %1109 = vmatpush1.bf16.msra.mxu0 0
        %1110 = vmatprep.subr.bf16.mxu0 0
        %1111 = vmatpush1.bf16.msra.mxu0 0
        %1112 = vmatprep.subr.bf16.mxu0 0
        %1113 = vmatpush1.bf16.msra.mxu0 0
        %1114 = vmatprep.subr.bf16.mxu0 0
        %1115 = vmatpush1.bf16.msra.mxu0 0
        %1116 = vmatprep.subr.bf16.mxu0 0
        %1117 = vmatpush1.bf16.msra.mxu0 0
        %1118 = vmatprep.subr.bf16.mxu0 0
        %1119 = vmatpush1.bf16.msra.mxu0 %v1104
        %1120 = vmatprep.subr.bf16.mxu0 0
        %1121 = vmatpush1.bf16.msra.mxu0 %v1096
        %1122 = vmatprep.subr.bf16.mxu0 0
        %1123 = vmatpush2.bf16.msra.mxu0 0
        %1124 = vmatprep.subr.bf16.mxu0 0
        %1125 = vmatpush2.bf16.msra.mxu0 0
        %1126 = vmatprep.subr.bf16.mxu0 0
        %1127 = vmatpush2.bf16.msra.mxu0 0
        %1128 = vmatprep.subr.bf16.mxu0 0
        %1129 = vmatpush2.bf16.msra.mxu0 0
        %1130 = vmatprep.subr.bf16.mxu0 0
        %1131 = vmatpush2.bf16.msra.mxu0 0
        %1132 = vmatprep.subr.bf16.mxu0 0
        %1133 = vmatpush2.bf16.msra.mxu0 0
        %1134 = vmatprep.subr.bf16.mxu0 0
        %1135 = vmatpush2.bf16.msra.mxu0 0
        %1136 = vmatprep.subr.bf16.mxu0 0
        %1137 = vmatpush2.bf16.msra.mxu0 0
        %1138 = vmatprep.mubr.bf16.mxu0 0
        %1139 = vmatmul.mubr.bf16.gmra.mxu0 %v1101
        %v1140 = vpop.f32.mrf.mxu0
        %v1141 = vadd.f32 0.0, %v1140
        %v1142 = vpop.f32.mrf.mxu0
        %v1143 = vpop.f32.mrf.mxu0
        %v1144 = vpop.f32.mrf.mxu0
        %1145 = vdwg.mxu0
        %1146 = vrot.lane.b32.xlu0 %v908, 112
        %v1147 = vpop.permute.xlu0 %1146
        %1148 = vrot.lane.b32.xlu0 %v909, 112
        %v1149 = vpop.permute.xlu0 %1148
        %1150 = vrot.lane.b32.xlu0 %v910, 112
        %v1151 = vpop.permute.xlu0 %1150
        %v1153 = vsel %vm913, %v1147, 0
        %v1156 = vsel %vm913, %v1149, 0
        %v1159 = vsel %vm913, %v1151, 0
        %1161 = vmatprep.subr.bf16.mxu0 0
        %1162 = vmatpush1.bf16.xpose.msra.mxu0 0
        %1163 = vmatprep.subr.bf16.mxu0 0
        %1164 = vmatpush1.bf16.xpose.msra.mxu0 0
        %1165 = vmatprep.subr.bf16.mxu0 0
        %1166 = vmatpush1.bf16.xpose.msra.mxu0 0
        %1167 = vmatprep.subr.bf16.mxu0 0
        %1168 = vmatpush1.bf16.xpose.msra.mxu0 0
        %1169 = vmatprep.subr.bf16.mxu0 0
        %1170 = vmatpush1.bf16.xpose.msra.mxu0 0
        %1171 = vmatprep.subr.bf16.mxu0 0
        %1172 = vmatpush1.bf16.xpose.msra.mxu0 0
        %1173 = vmatprep.subr.bf16.mxu0 0
        %1174 = vmatpush1.bf16.xpose.msra.mxu0 %v1159
        %1175 = vmatprep.subr.bf16.mxu0 0
        %1176 = vmatpush1.bf16.xpose.msra.mxu0 %v1156
        %1177 = vmatprep.subr.bf16.mxu0 0
        %1178 = vmatpush2.bf16.xpose.msra.mxu0 0
        %1179 = vmatprep.subr.bf16.mxu0 0
        %1180 = vmatpush2.bf16.xpose.msra.mxu0 0
        %1181 = vmatprep.subr.bf16.mxu0 0
        %1182 = vmatpush2.bf16.xpose.msra.mxu0 0
        %1183 = vmatprep.subr.bf16.mxu0 0
        %1184 = vmatpush2.bf16.xpose.msra.mxu0 0
        %1185 = vmatprep.subr.bf16.mxu0 0
        %1186 = vmatpush2.bf16.xpose.msra.mxu0 0
        %1187 = vmatprep.subr.bf16.mxu0 0
        %1188 = vmatpush2.bf16.xpose.msra.mxu0 0
        %1189 = vmatprep.subr.bf16.mxu0 0
        %1190 = vmatpush2.bf16.xpose.msra.mxu0 0
        %1191 = vmatprep.subr.bf16.mxu0 0
        %1192 = vmatpush2.bf16.xpose.msra.mxu0 0
        %1193 = vmatprep.mubr.bf16.mxu0 0
        %1194 = vmatmul.mubr.bf16.gmra.mxu0 %v1153
        %v1195 = vpop.f32.mrf.mxu0
        %v1196 = vadd.f32 0.0, %v1195
        %v1197 = vpop.f32.mrf.mxu0
        %v1198 = vpop.f32.mrf.mxu0
        %v1199 = vpop.f32.mrf.mxu0
        %1200 = vdwg.mxu0
        %v1201 = vsel %vm963, %v1196, -inf
        %1202 = vmax.xlane.f32.xlu0 %v1201
        %v1203 = vpop.xlane.xlu0 %1202
        %v1204 = vsub.f32 %v1196, %v1203
        %v1205 = vmul.f32 %v1204, 1.442695
        %v1206 = vpow.pop %v1205
        %v1207 = vsel %vm963, %v1206, 0.0
        %1208 = vadd.xlane.f32.xlu0 %v1207
        %v1209 = vpop.xlane.xlu0 %1208
        %v1210 = vrcp.pop %v1209
        %v1211 = vmul.f32 %v1206, %v1210
        %v1212 = vpack.c.bf16 %v1211, %v1211
        %1213 = vrot.lane.b32.xlu0 %v911, 112
        %v1214 = vpop.permute.xlu0 %1213
        %1215 = vrot.lane.b32.xlu0 %v912, 112
        %v1216 = vpop.permute.xlu0 %1215
        %v1219 = vsel %vm963, %v1212, 0
        %v1222 = vsel %vm979, %v1216, 0
        %1224 = vmatprep.subr.bf16.mxu0 0
        %1225 = vmatpush1.bf16.msra.mxu0 0
        %1226 = vmatprep.subr.bf16.mxu0 0
        %1227 = vmatpush1.bf16.msra.mxu0 0
        %1228 = vmatprep.subr.bf16.mxu0 0
        %1229 = vmatpush1.bf16.msra.mxu0 0
        %1230 = vmatprep.subr.bf16.mxu0 0
        %1231 = vmatpush1.bf16.msra.mxu0 0
        %1232 = vmatprep.subr.bf16.mxu0 0
        %1233 = vmatpush1.bf16.msra.mxu0 0
        %1234 = vmatprep.subr.bf16.mxu0 0
        %1235 = vmatpush1.bf16.msra.mxu0 0
        %1236 = vmatprep.subr.bf16.mxu0 0
        %1237 = vmatpush1.bf16.msra.mxu0 %v1222
        %1238 = vmatprep.subr.bf16.mxu0 0
        %1239 = vmatpush1.bf16.msra.mxu0 %v1214
        %1240 = vmatprep.subr.bf16.mxu0 0
        %1241 = vmatpush2.bf16.msra.mxu0 0
        %1242 = vmatprep.subr.bf16.mxu0 0
        %1243 = vmatpush2.bf16.msra.mxu0 0
        %1244 = vmatprep.subr.bf16.mxu0 0
        %1245 = vmatpush2.bf16.msra.mxu0 0
        %1246 = vmatprep.subr.bf16.mxu0 0
        %1247 = vmatpush2.bf16.msra.mxu0 0
        %1248 = vmatprep.subr.bf16.mxu0 0
        %1249 = vmatpush2.bf16.msra.mxu0 0
        %1250 = vmatprep.subr.bf16.mxu0 0
        %1251 = vmatpush2.bf16.msra.mxu0 0
        %1252 = vmatprep.subr.bf16.mxu0 0
        %1253 = vmatpush2.bf16.msra.mxu0 0
        %1254 = vmatprep.subr.bf16.mxu0 0
        %1255 = vmatpush2.bf16.msra.mxu0 0
        %1256 = vmatprep.mubr.bf16.mxu0 0
        %1257 = vmatmul.mubr.bf16.gmra.mxu0 %v1219
        %v1258 = vpop.f32.mrf.mxu0
        %v1259 = vadd.f32 0.0, %v1258
        %v1260 = vpop.f32.mrf.mxu0
        %v1261 = vpop.f32.mrf.mxu0
        %v1262 = vpop.f32.mrf.mxu0
        %1263 = vdwg.mxu0
        %1264 = vrot.lane.b32.xlu0 %v908, 104
        %v1265 = vpop.permute.xlu0 %1264
        %1266 = vrot.lane.b32.xlu0 %v909, 104
        %v1267 = vpop.permute.xlu0 %1266
        %1268 = vrot.lane.b32.xlu0 %v910, 104
        %v1269 = vpop.permute.xlu0 %1268
        %v1271 = vsel %vm913, %v1265, 0
        %v1274 = vsel %vm913, %v1267, 0
        %v1277 = vsel %vm913, %v1269, 0
        %1279 = vmatprep.subr.bf16.mxu0 0
        %1280 = vmatpush1.bf16.xpose.msra.mxu0 0
        %1281 = vmatprep.subr.bf16.mxu0 0
        %1282 = vmatpush1.bf16.xpose.msra.mxu0 0
        %1283 = vmatprep.subr.bf16.mxu0 0
        %1284 = vmatpush1.bf16.xpose.msra.mxu0 0
        %1285 = vmatprep.subr.bf16.mxu0 0
        %1286 = vmatpush1.bf16.xpose.msra.mxu0 0
        %1287 = vmatprep.subr.bf16.mxu0 0
        %1288 = vmatpush1.bf16.xpose.msra.mxu0 0
        %1289 = vmatprep.subr.bf16.mxu0 0
        %1290 = vmatpush1.bf16.xpose.msra.mxu0 0
        %1291 = vmatprep.subr.bf16.mxu0 0
        %1292 = vmatpush1.bf16.xpose.msra.mxu0 %v1277
        %1293 = vmatprep.subr.bf16.mxu0 0
        %1294 = vmatpush1.bf16.xpose.msra.mxu0 %v1274
        %1295 = vmatprep.subr.bf16.mxu0 0
        %1296 = vmatpush2.bf16.xpose.msra.mxu0 0
        %1297 = vmatprep.subr.bf16.mxu0 0
        %1298 = vmatpush2.bf16.xpose.msra.mxu0 0
        %1299 = vmatprep.subr.bf16.mxu0 0
        %1300 = vmatpush2.bf16.xpose.msra.mxu0 0
        %1301 = vmatprep.subr.bf16.mxu0 0
        %1302 = vmatpush2.bf16.xpose.msra.mxu0 0
        %1303 = vmatprep.subr.bf16.mxu0 0
        %1304 = vmatpush2.bf16.xpose.msra.mxu0 0
        %1305 = vmatprep.subr.bf16.mxu0 0
        %1306 = vmatpush2.bf16.xpose.msra.mxu0 0
        %1307 = vmatprep.subr.bf16.mxu0 0
        %1308 = vmatpush2.bf16.xpose.msra.mxu0 0
        %1309 = vmatprep.subr.bf16.mxu0 0
        %1310 = vmatpush2.bf16.xpose.msra.mxu0 0
        %1311 = vmatprep.mubr.bf16.mxu0 0
        %1312 = vmatmul.mubr.bf16.gmra.mxu0 %v1271
        %v1313 = vpop.f32.mrf.mxu0
        %v1314 = vadd.f32 0.0, %v1313
        %v1315 = vpop.f32.mrf.mxu0
        %v1316 = vpop.f32.mrf.mxu0
        %v1317 = vpop.f32.mrf.mxu0
        %1318 = vdwg.mxu0
        %v1319 = vsel %vm963, %v1314, -inf
        %1320 = vmax.xlane.f32.xlu0 %v1319
        %v1321 = vpop.xlane.xlu0 %1320
        %v1322 = vsub.f32 %v1314, %v1321
        %v1323 = vmul.f32 %v1322, 1.442695
        %v1324 = vpow.pop %v1323
        %v1325 = vsel %vm963, %v1324, 0.0
        %1326 = vadd.xlane.f32.xlu0 %v1325
        %v1327 = vpop.xlane.xlu0 %1326
        %v1328 = vrcp.pop %v1327
        %v1329 = vmul.f32 %v1324, %v1328
        %v1330 = vpack.c.bf16 %v1329, %v1329
        %1331 = vrot.lane.b32.xlu0 %v911, 104
        %v1332 = vpop.permute.xlu0 %1331
        %1333 = vrot.lane.b32.xlu0 %v912, 104
        %v1334 = vpop.permute.xlu0 %1333
        %v1337 = vsel %vm963, %v1330, 0
        %v1340 = vsel %vm979, %v1334, 0
        %1342 = vmatprep.subr.bf16.mxu0 0
        %1343 = vmatpush1.bf16.msra.mxu0 0
        %1344 = vmatprep.subr.bf16.mxu0 0
        %1345 = vmatpush1.bf16.msra.mxu0 0
        %1346 = vmatprep.subr.bf16.mxu0 0
        %1347 = vmatpush1.bf16.msra.mxu0 0
        %1348 = vmatprep.subr.bf16.mxu0 0
        %1349 = vmatpush1.bf16.msra.mxu0 0
        %1350 = vmatprep.subr.bf16.mxu0 0
        %1351 = vmatpush1.bf16.msra.mxu0 0
        %1352 = vmatprep.subr.bf16.mxu0 0
        %1353 = vmatpush1.bf16.msra.mxu0 0
        %1354 = vmatprep.subr.bf16.mxu0 0
        %1355 = vmatpush1.bf16.msra.mxu0 %v1340
        %1356 = vmatprep.subr.bf16.mxu0 0
        %1357 = vmatpush1.bf16.msra.mxu0 %v1332
        %1358 = vmatprep.subr.bf16.mxu0 0
        %1359 = vmatpush2.bf16.msra.mxu0 0
        %1360 = vmatprep.subr.bf16.mxu0 0
        %1361 = vmatpush2.bf16.msra.mxu0 0
        %1362 = vmatprep.subr.bf16.mxu0 0
        %1363 = vmatpush2.bf16.msra.mxu0 0
        %1364 = vmatprep.subr.bf16.mxu0 0
        %1365 = vmatpush2.bf16.msra.mxu0 0
        %1366 = vmatprep.subr.bf16.mxu0 0
        %1367 = vmatpush2.bf16.msra.mxu0 0
        %1368 = vmatprep.subr.bf16.mxu0 0
        %1369 = vmatpush2.bf16.msra.mxu0 0
        %1370 = vmatprep.subr.bf16.mxu0 0
        %1371 = vmatpush2.bf16.msra.mxu0 0
        %1372 = vmatprep.subr.bf16.mxu0 0
        %1373 = vmatpush2.bf16.msra.mxu0 0
        %1374 = vmatprep.mubr.bf16.mxu0 0
        %1375 = vmatmul.mubr.bf16.gmra.mxu0 %v1337
        %v1376 = vpop.f32.mrf.mxu0
        %v1377 = vadd.f32 0.0, %v1376
        %v1378 = vpop.f32.mrf.mxu0
        %v1379 = vpop.f32.mrf.mxu0
        %v1380 = vpop.f32.mrf.mxu0
        %1381 = vdwg.mxu0
        %1383 = vrot.lane.b32.xlu0 %v1141, 8
        %v1384 = vpop.permute.xlu0 %1383
        %1387 = vrot.lane.b32.xlu0 %v1259, 16
        %v1388 = vpop.permute.xlu0 %1387
        %1391 = vrot.lane.b32.xlu0 %v1377, 24
        %v1392 = vpop.permute.xlu0 %1391
        %v1394 = vsel %vm913, %v1018, %v1384
        %vm1395 = vcmask 130048
        %v1396 = vsel %vm1395, %v1394, %v1388
        %v1397 = vsel %vm963, %v1396, %v1392
        %v1398 = vpack.c.bf16 %v1397, %v1397
        %v1399 = vld [vmem:[#allocation16] sm:$0xf]
        %v1400 = vld [vmem:[#allocation16 + $0x4] sm:$0xf]
        %v1401 = vld [vmem:[#allocation16 + $0x8] sm:$0xf]
        %v1402 = vld [vmem:[#allocation16 + $0xc] sm:$0xf]
        %v1403 = vld [vmem:[%s13] sm:$0x1]
        %v1405 = vlaneseq
        %v1406 = vshrl.u32 %v1405, 7
        %v1407 = vsub.s32 0, %v1406
        %v1408 = vrot.slane %v1403, %v1407
        %v1414 = vunpack.c.l.b16 %v1399
        %v1415 = vunpack.c.l.b16 %v1400
        %v1416 = vunpack.c.l.b16 %v1401
        %v1417 = vunpack.c.l.b16 %v1402
        %v1418 = vpack.c.b16 %v1415, %v1414
        %v1419 = vpack.c.b16 %v1417, %v1416
        %v1423 = vsel %vm624, %v1398, 0
        %1425 = vmatprep.subr.bf16.mxu0 0
        %1426 = vmatpush1.bf16.msra.mxu0 0
        %1427 = vmatprep.subr.bf16.mxu0 0
        %1428 = vmatpush1.bf16.msra.mxu0 0
        %1429 = vmatprep.subr.bf16.mxu0 0
        %1430 = vmatpush1.bf16.msra.mxu0 0
        %1431 = vmatprep.subr.bf16.mxu0 0
        %1432 = vmatpush1.bf16.msra.mxu0 0
        %1433 = vmatprep.subr.bf16.mxu0 0
        %1434 = vmatpush1.bf16.msra.mxu0 0
        %1435 = vmatprep.subr.bf16.mxu0 0
        %1436 = vmatpush1.bf16.msra.mxu0 0
        %1437 = vmatprep.subr.bf16.mxu0 0
        %1438 = vmatpush1.bf16.msra.mxu0 %v1419
        %1439 = vmatprep.subr.bf16.mxu0 0
        %1440 = vmatpush1.bf16.msra.mxu0 %v1418
        %1441 = vmatprep.subr.bf16.mxu0 0
        %1442 = vmatpush2.bf16.msra.mxu0 0
        %1443 = vmatprep.subr.bf16.mxu0 0
        %1444 = vmatpush2.bf16.msra.mxu0 0
        %1445 = vmatprep.subr.bf16.mxu0 0
        %1446 = vmatpush2.bf16.msra.mxu0 0
        %1447 = vmatprep.subr.bf16.mxu0 0
        %1448 = vmatpush2.bf16.msra.mxu0 0
        %1449 = vmatprep.subr.bf16.mxu0 0
        %1450 = vmatpush2.bf16.msra.mxu0 0
        %1451 = vmatprep.subr.bf16.mxu0 0
        %1452 = vmatpush2.bf16.msra.mxu0 0
        %1453 = vmatprep.subr.bf16.mxu0 0
        %1454 = vmatpush2.bf16.msra.mxu0 0
        %1455 = vmatprep.subr.bf16.mxu0 0
        %1456 = vmatpush2.bf16.msra.mxu0 0
        %1457 = vmatprep.mubr.bf16.mxu0 0
        %1458 = vmatmul.mubr.bf16.gmra.mxu0 %v1423
        %v1459 = vpop.f32.mrf.mxu0
        %v1460 = vadd.f32 %v1408, %v1459
        %v1461 = vpop.f32.mrf.mxu0
        %v1462 = vpop.f32.mrf.mxu0
        %v1463 = vpop.f32.mrf.mxu0
        %1464 = vdwg.mxu0
        %1465 = vst.msk [vmem:[%s615] sm:$0xff] %vm624, %v1460
        %s1466 = sand.u32 %s349, 1
        %s1467 = scalar_lea.sflag [#allocation4], %s1466
        %s1468 = sand.u32 %s349, 1
        %s1469 = smul.addr %s1468, 8
        %s1470 = scalar_lea.vmem [#allocation17], %s1469
        // Predicated region
        $region113: #{tpu_custom_call.1} parent=75 // pred_check
          %p1471 = pneg %p359
        $region114: #{tpu_custom_call.1} parent=75 // pred_check_branch
          %1473 = sbr.rel (%p1471) target = $region116
        $region115: #{tpu_custom_call.1} parent=75 // pred_region
          %s1475 = ssub.s32 128, 128
          %1476 = vsyncadd %s1467, %s1475
          %s1477 = smul.addr %s37, 128
          %s1478 = scalar_lea.hbm %s14, %s1477
          %s1480 = sshll.u32 %s1470, 4
          %s1481 = int_to_ptr.vmem [resolvable:$true] %s1480
          %1483 = dma.vmem_to_hbm [thread:$0]  %s1481, 128, %s1478, %s1467
        $region116: #{tpu_custom_call.1} parent=75 // pred_fallthru
          _
      $region76: #{tpu_custom_call.1} parent=5 // pred_fallthru
        _
      %p1484 = scmp.le.s32.totalorder 2, %s32
      // Predicated region
      $region117: #{tpu_custom_call.1} parent=5 // pred_check
        %p1485 = pneg %p1484
      $region118: #{tpu_custom_call.1} parent=5 // pred_check_branch
        %1487 = sbr.rel (%p1485) target = $region120
      $region119: #{tpu_custom_call.1} parent=5 // pred_region
        %s1488 = ssub.s32 %s32, 2
        // Predicated region
        $region121: #{tpu_custom_call.1} parent=119 // pred_check
          %p1489 = pneg %p365
        $region122: #{tpu_custom_call.1} parent=119 // pred_check_branch
          %1491 = sbr.rel (%p1489) target = $region124
        $region123: #{tpu_custom_call.1} parent=119 // pred_region
          %s1492 = sand.u32 %s350, 1
          %s1493 = scalar_lea.sflag [#allocation4], %s1492
          %s1494 = sand.u32 %s350, 1
          %s1495 = smul.addr %s1494, 8
          %s1496 = scalar_lea.vmem [#allocation17], %s1495
          %1497 = dma.done %s1493, 128
        $region124: #{tpu_custom_call.1} parent=119 // pred_fallthru
          _
      $region120: #{tpu_custom_call.1} parent=5 // pred_fallthru
        _
    $region6: #{tpu_custom_call.1} parent=1 // loop_footer
      %s36 = sadd.s32 1, %s32
    $region7: #{tpu_custom_call.1} parent=1 // loop_footer_branch
      %31 = sbr.rel target = $region3
    $region8: #{tpu_custom_call.1} parent=1 // loop_exit
      _
    %1498 = vsyncpa [#allocation3], 1
    %s1499 = scalar_lea.sflag [#allocation3], 1
    %1500 = vsyncpa %s1499, 1
    %1501 = vsyncpa [#allocation6], 1
    %s1502 = scalar_lea.sflag [#allocation6], 1
    %1503 = vsyncpa %s1502, 1
    %1504 = vsyncpa [#allocation9], 1
    %1505 = vsyncpa [#allocation12], 1
    %1506 = vsyncpa [#allocation15], 1
    %1507 = vsyncpa [#allocation4], 1
    %s1508 = scalar_lea.sflag [#allocation4], 1
    %1509 = vsyncpa %s1508, 1

</llo_original>
